<compile_context>
chip_gen: v5e
topology: v5e:2x2
jax: 0.10.0
libtpu: 0.0.40
codegen_flags: <defaults>
</compile_context>

<pallas_src>
import jax
import jax.numpy as jnp
from jax.experimental import pallas as pl
from jax.experimental.pallas import tpu as pltpu

OUT_PAD = 128  # lane-dense padded width for the final (256 -> 1) layer


def _leaky_relu(h, slope=0.2):
    # nn.LeakyReLU(0.2): h if h >= 0 else 0.2 * h  (slope < 1 -> max form is equivalent)
    return jnp.maximum(h, slope * h)


def _choose_batch_tile(B, batch_tile):
    """Pick a batch tile that:
      (a) satisfies the (8,128) sublane rule -- either a multiple of 256 or the full batch,
          regardless of the user-supplied batch_tile;
      (b) is large enough to amortize the ~0.35 us fixed per-grid-step pipeline overhead;
      (c) yields >= 2 grid steps on large batches so megacore (v7x) can split the batch axis;
      (d) never requires padding x (partial last block is handled by Pallas boundary masking).
    """
    if B <= 256 or (B <= batch_tile and B < 512):
        return B                                        # single full-extent block
    tb = max(256, (min(batch_tile, B) // 256) * 256)    # force a 256-row multiple
    if tb >= B:                                         # guarantee >= 2 grid steps
        tb = max(256, ((B // 2) // 256) * 256)
    return tb


def fc_discriminator_kernel(x_ref,
                            w1_ref, b1_ref,
                            w2_ref, b2_ref,
                            w3_ref, b3_ref,
                            w4_ref, b4_ref,
                            out_ref):
    """One batch tile of the full FC-discriminator forward.

    x_ref  : (TB, D)       input tile (bf16 preferred; cast is a no-op then)
    wK_ref : (D_in, D_out) bf16 transposed Linear weights (VMEM-resident, single-buffered)
    bK_ref : (1, D_out)    f32 biases
    out_ref: (TB, OUT_PAD) bf16 logits; only column 0 is meaningful.
    """
    h = x_ref[...].astype(jnp.bfloat16)

    # make_fc_block 1: Linear(D, 512) + LeakyReLU(0.2)
    h = jnp.dot(h, w1_ref[...], preferred_element_type=jnp.float32) + b1_ref[...]
    h = _leaky_relu(h).astype(jnp.bfloat16)

    # make_fc_block 2: Linear(512, 256) + LeakyReLU(0.2)
    h = jnp.dot(h, w2_ref[...], preferred_element_type=jnp.float32) + b2_ref[...]
    h = _leaky_relu(h).astype(jnp.bfloat16)

    # make_fc_block 3: Linear(256, 256) + LeakyReLU(0.2)
    h = jnp.dot(h, w3_ref[...], preferred_element_type=jnp.float32) + b3_ref[...]
    h = _leaky_relu(h).astype(jnp.bfloat16)

    # out_fn: Linear(256, 1) padded to OUT_PAD lanes (output_type='logit' -> no sigmoid)
    logits = jnp.dot(h, w4_ref[...], preferred_element_type=jnp.float32) + b4_ref[...]
    out_ref[...] = logits.astype(out_ref.dtype)


def fc_discriminator_forward(x, packed_params, *, batch_tile=1024):
    """x: (B, C, H, W) or (B, D) -- bf16 preferred; packed_params: list of
    (w bf16 (in,out), b f32 (1,out)), last layer padded to OUT_PAD columns.
    Returns (B, 1) f32 logits."""
    B = x.shape[0]
    x_flat = x.reshape(B, -1)                 # torch .view(len(x), -1); no dtype cast here
    D = x_flat.shape[1]

    TB = _choose_batch_tile(B, batch_tile)
    grid = (pl.cdiv(B, TB),)                  # partial last block masked by Pallas; no pad op

    flat_params = []
    for w, b in packed_params:
        flat_params.extend([w, b])

    # x is re-tiled each grid step (auto double-buffered); weights/biases use a constant
    # block index + Buffered(1) so Pallas keeps a single resident copy in VMEM.
    in_specs = [pl.BlockSpec((TB, D), lambda i: (i, 0))]
    for p in flat_params:
        in_specs.append(
            pl.BlockSpec(p.shape, lambda i: (0, 0), pipeline_mode=pl.Buffered(1)))

    out = pl.pallas_call(
        fc_discriminator_kernel,
        out_shape=jax.ShapeDtypeStruct((B, OUT_PAD), jnp.bfloat16),
        grid=grid,
        in_specs=in_specs,
        out_specs=pl.BlockSpec((TB, OUT_PAD), lambda i: (i, 0)),
        compiler_params=pltpu.CompilerParams(
            dimension_semantics=("parallel",),   # megacore on v7x; harmless on v5e/v6e
        ),
    )(x_flat, *flat_params)

    # Drop the zero-padded output lanes; present f32 logits like the PyTorch module.
    return out[:, :1].astype(jnp.float32)


def init_params(key, in_dim, hidden_dims=(512, 256, 256)):
    """Deterministic synthetic init (module __init__ defines the shapes only)."""
    dims = [in_dim, *hidden_dims, 1]
    params = []
    for d_in, d_out in zip(dims, dims[1:]):
        key, kw, kb = jax.random.split(key, 3)
        # store weight transposed: (d_in, d_out)
        w = jax.random.normal(kw, (d_in, d_out), dtype=jnp.float32) * 0.02
        b = jax.random.normal(kb, (1, d_out), dtype=jnp.float32) * 0.01
        params.append((w, b))
    return params


def pack_params(params):
    """bf16 weights / f32 biases; pad the final (., 1) layer to OUT_PAD lane-dense columns."""
    packed = []
    n = len(params)
    for i, (w, b) in enumerate(params):
        w = w.astype(jnp.bfloat16)
        b = b.astype(jnp.float32)
        if i == n - 1 and w.shape[1] < OUT_PAD:
            w = jnp.pad(w, ((0, 0), (0, OUT_PAD - w.shape[1])))
            b = jnp.pad(b, ((0, 0), (0, OUT_PAD - b.shape[1])))
        packed.append((w, b))
    return packed


def reference_forward(x, packed_params):
    """Pure-JAX reference mirroring the kernel math (bf16 matmuls, f32 accumulation)."""
    h = x.reshape(x.shape[0], -1)
    n = len(packed_params)
    for i, (w, b) in enumerate(packed_params):
        h = jnp.dot(h.astype(jnp.bfloat16), w, preferred_element_type=jnp.float32) + b
        if i < n - 1:
            h = jnp.maximum(h, 0.2 * h)
    return h[:, :1]


if __name__ == "__main__":
    key = jax.random.PRNGKey(0)
    kx, kp = jax.random.split(key)

    # small shapes consistent with the module: in_shape = (C, H, W) = (4, 16, 16)
    B, C, H, W = 2, 4, 16, 16
    # Caller contract: producer emits bf16 so the kernel's x DMA is half the bytes (v6e win).
    x = jax.random.normal(kx, (B, C, H, W), dtype=jnp.bfloat16)

    in_dim = C * H * W  # data_dim = prod(in_shape) = 1024
    params = init_params(kp, in_dim, hidden_dims=(512, 256, 256))
    packed = pack_params(params)

    out = fc_discriminator_forward(x, packed)
    out = jax.block_until_ready(out)

    ref = reference_forward(x, packed)
    assert out.shape == (B, 1), out.shape
    assert jnp.allclose(out, ref, atol=2e-2, rtol=2e-2), (out, ref)

    print("KERNEL_OK")
</pallas_src>

<mosaic_0001>
module attributes {stable_mosaic.version = 11 : i64} {
  func.func @fc_discriminator_kernel(%arg0: i32, %arg1: memref<2x1024xbf16, #tpu.memory_space<vmem>>, %arg2: memref<1024x512xbf16, #tpu.memory_space<vmem>>, %arg3: memref<1x512xf32, #tpu.memory_space<vmem>>, %arg4: memref<512x256xbf16, #tpu.memory_space<vmem>>, %arg5: memref<1x256xf32, #tpu.memory_space<vmem>>, %arg6: memref<256x256xbf16, #tpu.memory_space<vmem>>, %arg7: memref<1x256xf32, #tpu.memory_space<vmem>>, %arg8: memref<256x128xbf16, #tpu.memory_space<vmem>>, %arg9: memref<1x128xf32, #tpu.memory_space<vmem>>, %arg10: memref<2x128xbf16, #tpu.memory_space<vmem>>) attributes {dimension_semantics = [#tpu.dimension_semantics<parallel>], iteration_bounds = array<i64: 1>, scalar_prefetch = 0 : i64, scratch_operands = 0 : i64, tpu.core_type = #tpu.core_type<tc>, window_params = [{transform_indices = @transform_0, window_bounds = array<i64: 2, 1024>}, {pipeline_mode = #tpu.pipeline_mode<synchronous>, transform_indices = @transform_1, window_bounds = array<i64: 1024, 512>}, {pipeline_mode = #tpu.pipeline_mode<synchronous>, transform_indices = @transform_2, window_bounds = array<i64: 1, 512>}, {pipeline_mode = #tpu.pipeline_mode<synchronous>, transform_indices = @transform_3, window_bounds = array<i64: 512, 256>}, {pipeline_mode = #tpu.pipeline_mode<synchronous>, transform_indices = @transform_4, window_bounds = array<i64: 1, 256>}, {pipeline_mode = #tpu.pipeline_mode<synchronous>, transform_indices = @transform_5, window_bounds = array<i64: 256, 256>}, {pipeline_mode = #tpu.pipeline_mode<synchronous>, transform_indices = @transform_6, window_bounds = array<i64: 1, 256>}, {pipeline_mode = #tpu.pipeline_mode<synchronous>, transform_indices = @transform_7, window_bounds = array<i64: 256, 128>}, {pipeline_mode = #tpu.pipeline_mode<synchronous>, transform_indices = @transform_8, window_bounds = array<i64: 1, 128>}, {transform_indices = @transform_9, window_bounds = array<i64: 2, 128>}]} {
    %c0 = arith.constant 0 : index
    %c0_0 = arith.constant 0 : index
    %0 = vector.load %arg1[%c0, %c0_0] : memref<2x1024xbf16, #tpu.memory_space<vmem>>, vector<2x1024xbf16>
    %c0_1 = arith.constant 0 : index
    %c0_2 = arith.constant 0 : index
    %1 = vector.load %arg2[%c0_1, %c0_2] : memref<1024x512xbf16, #tpu.memory_space<vmem>>, vector<1024x512xbf16>
    %cst = arith.constant dense<0.000000e+00> : vector<2x512xf32>
    %2 = tpu.matmul %0, %1, %cst {dimension_numbers = #tpu.dot_dimension_numbers<[1], [0], [0], [1], [0, 0, 1, 1], [], []>} : vector<2x1024xbf16>, vector<1024x512xbf16>, vector<2x512xf32> -> vector<2x512xf32>
    %c0_3 = arith.constant 0 : index
    %c0_4 = arith.constant 0 : index
    %3 = vector.load %arg3[%c0_3, %c0_4] : memref<1x512xf32, #tpu.memory_space<vmem>>, vector<1x512xf32>
    %4 = vector.broadcast %3 : vector<1x512xf32> to vector<2x512xf32>
    %5 = arith.addf %2, %4 : vector<2x512xf32>
    %cst_5 = arith.constant 2.000000e-01 : f32
    %6 = vector.broadcast %cst_5 : f32 to vector<2x512xf32>
    %7 = arith.mulf %6, %5 : vector<2x512xf32>
    %8 = arith.maximumf %5, %7 : vector<2x512xf32>
    %9 = arith.truncf %8 : vector<2x512xf32> to vector<2x512xbf16>
    %c0_6 = arith.constant 0 : index
    %c0_7 = arith.constant 0 : index
    %10 = vector.load %arg4[%c0_6, %c0_7] : memref<512x256xbf16, #tpu.memory_space<vmem>>, vector<512x256xbf16>
    %cst_8 = arith.constant dense<0.000000e+00> : vector<2x256xf32>
    %11 = tpu.matmul %9, %10, %cst_8 {dimension_numbers = #tpu.dot_dimension_numbers<[1], [0], [0], [1], [0, 0, 1, 1], [], []>} : vector<2x512xbf16>, vector<512x256xbf16>, vector<2x256xf32> -> vector<2x256xf32>
    %c0_9 = arith.constant 0 : index
    %c0_10 = arith.constant 0 : index
    %12 = vector.load %arg5[%c0_9, %c0_10] : memref<1x256xf32, #tpu.memory_space<vmem>>, vector<1x256xf32>
    %13 = vector.broadcast %12 : vector<1x256xf32> to vector<2x256xf32>
    %14 = arith.addf %11, %13 : vector<2x256xf32>
    %cst_11 = arith.constant 2.000000e-01 : f32
    %15 = vector.broadcast %cst_11 : f32 to vector<2x256xf32>
    %16 = arith.mulf %15, %14 : vector<2x256xf32>
    %17 = arith.maximumf %14, %16 : vector<2x256xf32>
    %18 = arith.truncf %17 : vector<2x256xf32> to vector<2x256xbf16>
    %c0_12 = arith.constant 0 : index
    %c0_13 = arith.constant 0 : index
    %19 = vector.load %arg6[%c0_12, %c0_13] : memref<256x256xbf16, #tpu.memory_space<vmem>>, vector<256x256xbf16>
    %cst_14 = arith.constant dense<0.000000e+00> : vector<2x256xf32>
    %20 = tpu.matmul %18, %19, %cst_14 {dimension_numbers = #tpu.dot_dimension_numbers<[1], [0], [0], [1], [0, 0, 1, 1], [], []>} : vector<2x256xbf16>, vector<256x256xbf16>, vector<2x256xf32> -> vector<2x256xf32>
    %c0_15 = arith.constant 0 : index
    %c0_16 = arith.constant 0 : index
    %21 = vector.load %arg7[%c0_15, %c0_16] : memref<1x256xf32, #tpu.memory_space<vmem>>, vector<1x256xf32>
    %22 = vector.broadcast %21 : vector<1x256xf32> to vector<2x256xf32>
    %23 = arith.addf %20, %22 : vector<2x256xf32>
    %cst_17 = arith.constant 2.000000e-01 : f32
    %24 = vector.broadcast %cst_17 : f32 to vector<2x256xf32>
    %25 = arith.mulf %24, %23 : vector<2x256xf32>
    %26 = arith.maximumf %23, %25 : vector<2x256xf32>
    %27 = arith.truncf %26 : vector<2x256xf32> to vector<2x256xbf16>
    %c0_18 = arith.constant 0 : index
    %c0_19 = arith.constant 0 : index
    %28 = vector.load %arg8[%c0_18, %c0_19] : memref<256x128xbf16, #tpu.memory_space<vmem>>, vector<256x128xbf16>
    %cst_20 = arith.constant dense<0.000000e+00> : vector<2x128xf32>
    %29 = tpu.matmul %27, %28, %cst_20 {dimension_numbers = #tpu.dot_dimension_numbers<[1], [0], [0], [1], [0, 0, 1, 1], [], []>} : vector<2x256xbf16>, vector<256x128xbf16>, vector<2x128xf32> -> vector<2x128xf32>
    %c0_21 = arith.constant 0 : index
    %c0_22 = arith.constant 0 : index
    %30 = vector.load %arg9[%c0_21, %c0_22] : memref<1x128xf32, #tpu.memory_space<vmem>>, vector<1x128xf32>
    %31 = vector.broadcast %30 : vector<1x128xf32> to vector<2x128xf32>
    %32 = arith.addf %29, %31 : vector<2x128xf32>
    %33 = arith.truncf %32 : vector<2x128xf32> to vector<2x128xbf16>
    %c0_23 = arith.constant 0 : index
    %c0_24 = arith.constant 0 : index
    %34 = vector.load %arg10[%c0_23, %c0_24] : memref<2x128xbf16, #tpu.memory_space<vmem>>, vector<2x128xbf16>
    tpu.vector_store %arg10[%c0_23, %c0_24], %33 {strides = array<i32>} : memref<2x128xbf16, #tpu.memory_space<vmem>>, vector<2x128xbf16>,
    return
  }
  func.func @transform_0(%arg0: i32) -> (i32, i32) {
    %c0_i32 = arith.constant 0 : i32
    %c0_i32_0 = arith.constant 0 : i32
    return %arg0, %c0_i32 : i32, i32
  }
  func.func @transform_1(%arg0: i32) -> (i32, i32) {
    %c0_i32 = arith.constant 0 : i32
    %c0_i32_0 = arith.constant 0 : i32
    %c0_i32_1 = arith.constant 0 : i32
    return %c0_i32, %c0_i32_0 : i32, i32
  }
  func.func @transform_2(%arg0: i32) -> (i32, i32) {
    %c0_i32 = arith.constant 0 : i32
    %c0_i32_0 = arith.constant 0 : i32
    %c0_i32_1 = arith.constant 0 : i32
    return %c0_i32, %c0_i32_0 : i32, i32
  }
  func.func @transform_3(%arg0: i32) -> (i32, i32) {
    %c0_i32 = arith.constant 0 : i32
    %c0_i32_0 = arith.constant 0 : i32
    %c0_i32_1 = arith.constant 0 : i32
    return %c0_i32, %c0_i32_0 : i32, i32
  }
  func.func @transform_4(%arg0: i32) -> (i32, i32) {
    %c0_i32 = arith.constant 0 : i32
    %c0_i32_0 = arith.constant 0 : i32
    %c0_i32_1 = arith.constant 0 : i32
    return %c0_i32, %c0_i32_0 : i32, i32
  }
  func.func @transform_5(%arg0: i32) -> (i32, i32) {
    %c0_i32 = arith.constant 0 : i32
    %c0_i32_0 = arith.constant 0 : i32
    %c0_i32_1 = arith.constant 0 : i32
    return %c0_i32, %c0_i32_0 : i32, i32
  }
  func.func @transform_6(%arg0: i32) -> (i32, i32) {
    %c0_i32 = arith.constant 0 : i32
    %c0_i32_0 = arith.constant 0 : i32
    %c0_i32_1 = arith.constant 0 : i32
    return %c0_i32, %c0_i32_0 : i32, i32
  }
  func.func @transform_7(%arg0: i32) -> (i32, i32) {
    %c0_i32 = arith.constant 0 : i32
    %c0_i32_0 = arith.constant 0 : i32
    %c0_i32_1 = arith.constant 0 : i32
    return %c0_i32, %c0_i32_0 : i32, i32
  }
  func.func @transform_8(%arg0: i32) -> (i32, i32) {
    %c0_i32 = arith.constant 0 : i32
    %c0_i32_0 = arith.constant 0 : i32
    %c0_i32_1 = arith.constant 0 : i32
    return %c0_i32, %c0_i32_0 : i32, i32
  }
  func.func @transform_9(%arg0: i32) -> (i32, i32) {
    %c0_i32 = arith.constant 0 : i32
    %c0_i32_0 = arith.constant 0 : i32
    return %arg0, %c0_i32 : i32, i32
  }
}

</mosaic_0001>

<llo_original>
// kernel: tpu_custom_call.1
$region0: #{tpu_custom_call.1}
  #allocation0 [shape = 'u32[]', space=smem, size = 0x4, offset = 0x4, fixed_abs, tag = 'smem constant byte address 0x4 - core index']
  #allocation1 [shape = 'u32[72,128]{1,0:T(1,128)}', space=vmem, size = 0x9000, scoped, tag = 'internal scratch']
  %s0 = inlined_call_operand.hbm [shape: bf16[2,1024], index: 0, kind: input, shape index: {}]
  %s1 = inlined_call_operand.hbm [shape: bf16[1024,512], index: 1, kind: input, shape index: {}]
  %s2 = inlined_call_operand.hbm [shape: f32[1,512], index: 2, kind: input, shape index: {}]
  %s3 = inlined_call_operand.hbm [shape: bf16[512,256], index: 3, kind: input, shape index: {}]
  %s4 = inlined_call_operand.vmem [shape: f32[1,256], index: 4, kind: input, shape index: {}]
  %s5 = inlined_call_operand.hbm [shape: bf16[256,256], index: 5, kind: input, shape index: {}]
  %s6 = inlined_call_operand.vmem [shape: f32[1,256], index: 6, kind: input, shape index: {}]
  %s7 = inlined_call_operand.hbm [shape: bf16[256,128], index: 7, kind: input, shape index: {}]
  %s8 = inlined_call_operand.vmem [shape: f32[1,128], index: 8, kind: input, shape index: {}]
  %s9 = inlined_call_operand.hbm [shape: bf16[2,128], index: 9, kind: output, shape index: {}]
  %s10 = sld [smem:[#allocation0]]
  $region70: #{tpu_custom_call.1} parent=0
    _
  %s12 = ssub.s32 1, %s10
  %s13 = scalar_select 0, %s12, %s10
  $region1: #{tpu_custom_call.1} parent=0
    #allocation2 [shape = 'u8[4096]{0}', space=vmem, size = 0x1000, scoped, tag = 'input window, operand 0, single buffered']
    #allocation3 [shape = 's32[1]{0}', space=sflag, size = 0x4, scoped, tag = 'scoped memory for tpu_custom_call.1']
    #allocation4 [shape = 's32[1]{0}', space=sflag, size = 0x4, scoped, tag = 'scoped memory for tpu_custom_call.1']
    #allocation5 [shape = 'u8[1048576]{0}', space=vmem, size = 0x100000, scoped, tag = 'input window, operand 1, single buffered']
    #allocation6 [shape = 's32[1]{0}', space=sflag, size = 0x4, scoped, tag = 'scoped memory for tpu_custom_call.1']
    #allocation7 [shape = 'u8[2048]{0}', space=vmem, size = 0x800, scoped, tag = 'input window, operand 2, single buffered']
    #allocation8 [shape = 'u8[262144]{0}', space=vmem, size = 0x40000, scoped, tag = 'input window, operand 3, single buffered']
    #allocation9 [shape = 's32[1]{0}', space=sflag, size = 0x4, scoped, tag = 'scoped memory for tpu_custom_call.1']
    #allocation10 [shape = 'u8[131072]{0}', space=vmem, size = 0x20000, scoped, tag = 'input window, operand 5, single buffered']
    #allocation11 [shape = 'u8[65536]{0}', space=vmem, size = 0x10000, scoped, tag = 'input window, operand 7, single buffered']
    #allocation12 [shape = 's32[1]{0}', space=sflag, size = 0x4, scoped, tag = 'scoped memory for tpu_custom_call.1']
    #allocation13 [shape = 'u8[512]{0}', space=vmem, size = 0x400, scoped, tag = 'output window, operand 0, single buffered']
    %14 = vsyncpa [#allocation3], 0
    %15 = vsyncpa [#allocation6], 0
    %16 = vsyncpa [#allocation9], 0
    %17 = vsyncpa [#allocation12], 0
    %18 = vsyncpa [#allocation4], 0
    // Predicated region
    $region2: #{tpu_custom_call.1} parent=1 // pred_check
      _
    $region3: #{tpu_custom_call.1} parent=1 // pred_check_branch
      %20 = sbr.rel (0) target = $region5
    $region4: #{tpu_custom_call.1} parent=1 // pred_region
      %22 = vsyncadd [#allocation3], 0
      %s24 = sshll.u32 %s0, 4
      %s25 = int_to_ptr.hbm [resolvable:$true] %s24
      %s26 = sshll.u32 [#allocation2], 4
      %s27 = int_to_ptr.vmem [resolvable:$true] %s26
      %29 = dma.hbm_to_vmem [thread:$0]  %s25, 128, %s27, [#allocation3]
    $region5: #{tpu_custom_call.1} parent=1 // pred_fallthru
      _
    // Predicated region
    $region6: #{tpu_custom_call.1} parent=1 // pred_check
      _
    $region7: #{tpu_custom_call.1} parent=1 // pred_check_branch
      %31 = sbr.rel (0) target = $region9
    $region8: #{tpu_custom_call.1} parent=1 // pred_region
      %33 = vsyncadd [#allocation6], 0
      %s34 = sshll.u32 %s1, 4
      %s35 = int_to_ptr.hbm [resolvable:$true] %s34
      %s36 = sshll.u32 [#allocation5], 4
      %s37 = int_to_ptr.vmem [resolvable:$true] %s36
      %42 = dma.hbm_to_vmem [thread:$0]  %s35, 32768, %s37, [#allocation6], 256, 256, 16
    $region9: #{tpu_custom_call.1} parent=1 // pred_fallthru
      _
    // Predicated region
    $region10: #{tpu_custom_call.1} parent=1 // pred_check
      _
    $region11: #{tpu_custom_call.1} parent=1 // pred_check_branch
      %44 = sbr.rel (0) target = $region13
    $region12: #{tpu_custom_call.1} parent=1 // pred_region
      %46 = vsyncadd [#allocation6], 0
      %s48 = sshll.u32 %s2, 4
      %s49 = int_to_ptr.hbm [resolvable:$true] %s48
      %s50 = sshll.u32 [#allocation7], 4
      %s51 = int_to_ptr.vmem [resolvable:$true] %s50
      %53 = dma.hbm_to_vmem [thread:$0]  %s49, 64, %s51, [#allocation6]
    $region13: #{tpu_custom_call.1} parent=1 // pred_fallthru
      _
    // Predicated region
    $region14: #{tpu_custom_call.1} parent=1 // pred_check
      _
    $region15: #{tpu_custom_call.1} parent=1 // pred_check_branch
      %55 = sbr.rel (0) target = $region17
    $region16: #{tpu_custom_call.1} parent=1 // pred_region
      %57 = vsyncadd [#allocation9], 0
      %s58 = sshll.u32 %s3, 4
      %s59 = int_to_ptr.hbm [resolvable:$true] %s58
      %s60 = sshll.u32 [#allocation8], 4
      %s61 = int_to_ptr.vmem [resolvable:$true] %s60
      %66 = dma.hbm_to_vmem [thread:$0]  %s59, 8192, %s61, [#allocation9], 128, 128, 8
    $region17: #{tpu_custom_call.1} parent=1 // pred_fallthru
      _
    // Predicated region
    $region18: #{tpu_custom_call.1} parent=1 // pred_check
      _
    $region19: #{tpu_custom_call.1} parent=1 // pred_check_branch
      %68 = sbr.rel (0) target = $region21
    $region20: #{tpu_custom_call.1} parent=1 // pred_region
      _
    $region21: #{tpu_custom_call.1} parent=1 // pred_fallthru
      _
    // Predicated region
    $region22: #{tpu_custom_call.1} parent=1 // pred_check
      _
    $region23: #{tpu_custom_call.1} parent=1 // pred_check_branch
      %70 = sbr.rel (0) target = $region25
    $region24: #{tpu_custom_call.1} parent=1 // pred_region
      %72 = vsyncadd [#allocation9], 0
      %s73 = sshll.u32 %s5, 4
      %s74 = int_to_ptr.hbm [resolvable:$true] %s73
      %s75 = sshll.u32 [#allocation10], 4
      %s76 = int_to_ptr.vmem [resolvable:$true] %s75
      %81 = dma.hbm_to_vmem [thread:$0]  %s74, 4096, %s76, [#allocation9], 128, 128, 8
    $region25: #{tpu_custom_call.1} parent=1 // pred_fallthru
      _
    // Predicated region
    $region26: #{tpu_custom_call.1} parent=1 // pred_check
      _
    $region27: #{tpu_custom_call.1} parent=1 // pred_check_branch
      %83 = sbr.rel (0) target = $region29
    $region28: #{tpu_custom_call.1} parent=1 // pred_region
      _
    $region29: #{tpu_custom_call.1} parent=1 // pred_fallthru
      _
    // Predicated region
    $region30: #{tpu_custom_call.1} parent=1 // pred_check
      _
    $region31: #{tpu_custom_call.1} parent=1 // pred_check_branch
      %85 = sbr.rel (0) target = $region33
    $region32: #{tpu_custom_call.1} parent=1 // pred_region
      %87 = vsyncadd [#allocation12], 0
      %s88 = sshll.u32 %s7, 4
      %s89 = int_to_ptr.hbm [resolvable:$true] %s88
      %s90 = sshll.u32 [#allocation11], 4
      %s91 = int_to_ptr.vmem [resolvable:$true] %s90
      %96 = dma.hbm_to_vmem [thread:$0]  %s89, 2048, %s91, [#allocation12], 64, 64, 4
    $region33: #{tpu_custom_call.1} parent=1 // pred_fallthru
      _
    // Predicated region
    $region34: #{tpu_custom_call.1} parent=1 // pred_check
      _
    $region35: #{tpu_custom_call.1} parent=1 // pred_check_branch
      %98 = sbr.rel (0) target = $region37
    $region36: #{tpu_custom_call.1} parent=1 // pred_region
      _
    $region37: #{tpu_custom_call.1} parent=1 // pred_fallthru
      _
    // Predicated region
    $region38: #{tpu_custom_call.1} parent=1 // pred_check
      _
    $region39: #{tpu_custom_call.1} parent=1 // pred_check_branch
      %100 = sbr.rel (0) target = $region41
    $region40: #{tpu_custom_call.1} parent=1 // pred_region
      %102 = dma.done [#allocation3], 128
    $region41: #{tpu_custom_call.1} parent=1 // pred_fallthru
      _
    // Predicated region
    $region42: #{tpu_custom_call.1} parent=1 // pred_check
      _
    $region43: #{tpu_custom_call.1} parent=1 // pred_check_branch
      %104 = sbr.rel (0) target = $region45
    $region44: #{tpu_custom_call.1} parent=1 // pred_region
      %106 = dma.done [#allocation6], 32768
    $region45: #{tpu_custom_call.1} parent=1 // pred_fallthru
      _
    // Predicated region
    $region46: #{tpu_custom_call.1} parent=1 // pred_check
      _
    $region47: #{tpu_custom_call.1} parent=1 // pred_check_branch
      %108 = sbr.rel (0) target = $region49
    $region48: #{tpu_custom_call.1} parent=1 // pred_region
      %110 = dma.done [#allocation6], 64
    $region49: #{tpu_custom_call.1} parent=1 // pred_fallthru
      _
    // Predicated region
    $region50: #{tpu_custom_call.1} parent=1 // pred_check
      _
    $region51: #{tpu_custom_call.1} parent=1 // pred_check_branch
      %112 = sbr.rel (0) target = $region53
    $region52: #{tpu_custom_call.1} parent=1 // pred_region
      %114 = dma.done [#allocation9], 8192
    $region53: #{tpu_custom_call.1} parent=1 // pred_fallthru
      _
    // Predicated region
    $region54: #{tpu_custom_call.1} parent=1 // pred_check
      _
    $region55: #{tpu_custom_call.1} parent=1 // pred_check_branch
      %116 = sbr.rel (0) target = $region57
    $region56: #{tpu_custom_call.1} parent=1 // pred_region
      %118 = dma.done [#allocation9], 4096
    $region57: #{tpu_custom_call.1} parent=1 // pred_fallthru
      _
    // Predicated region
    $region58: #{tpu_custom_call.1} parent=1 // pred_check
      _
    $region59: #{tpu_custom_call.1} parent=1 // pred_check_branch
      %120 = sbr.rel (0) target = $region61
    $region60: #{tpu_custom_call.1} parent=1 // pred_region
      %122 = dma.done [#allocation12], 2048
    $region61: #{tpu_custom_call.1} parent=1 // pred_fallthru
      _
    %v123 = vld [vmem:[#allocation2] sm:$0xff]
    %v124 = vld [vmem:[#allocation5] sm:$0xff]
    %v125 = vld [vmem:[#allocation5 + $0x8] sm:$0xff]
    %v126 = vld [vmem:[#allocation5 + $0x10] sm:$0xff]
    %v127 = vld [vmem:[#allocation5 + $0x18] sm:$0xff]
    %v128 = vld [vmem:[#allocation5 + $0x20] sm:$0xff]
    %v129 = vld [vmem:[#allocation5 + $0x28] sm:$0xff]
    %v130 = vld [vmem:[#allocation5 + $0x30] sm:$0xff]
    %v131 = vld [vmem:[#allocation5 + $0x38] sm:$0xff]
    %v132 = vld [vmem:[#allocation5 + $0x40] sm:$0xff]
    %v133 = vld [vmem:[#allocation5 + $0x48] sm:$0xff]
    %v134 = vld [vmem:[#allocation5 + $0x50] sm:$0xff]
    %v135 = vld [vmem:[#allocation5 + $0x58] sm:$0xff]
    %v136 = vld [vmem:[#allocation5 + $0x60] sm:$0xff]
    %v137 = vld [vmem:[#allocation5 + $0x68] sm:$0xff]
    %v138 = vld [vmem:[#allocation5 + $0x70] sm:$0xff]
    %v139 = vld [vmem:[#allocation5 + $0x78] sm:$0xff]
    %v140 = vld [vmem:[#allocation5 + $0x80] sm:$0xff]
    %v141 = vld [vmem:[#allocation5 + $0x88] sm:$0xff]
    %v142 = vld [vmem:[#allocation5 + $0x90] sm:$0xff]
    %v143 = vld [vmem:[#allocation5 + $0x98] sm:$0xff]
    %v144 = vld [vmem:[#allocation5 + $0xa0] sm:$0xff]
    %v145 = vld [vmem:[#allocation5 + $0xa8] sm:$0xff]
    %v146 = vld [vmem:[#allocation5 + $0xb0] sm:$0xff]
    %v147 = vld [vmem:[#allocation5 + $0xb8] sm:$0xff]
    %v148 = vld [vmem:[#allocation5 + $0xc0] sm:$0xff]
    %v149 = vld [vmem:[#allocation5 + $0xc8] sm:$0xff]
    %v150 = vld [vmem:[#allocation5 + $0xd0] sm:$0xff]
    %v151 = vld [vmem:[#allocation5 + $0xd8] sm:$0xff]
    %v152 = vld [vmem:[#allocation5 + $0xe0] sm:$0xff]
    %v153 = vld [vmem:[#allocation5 + $0xe8] sm:$0xff]
    %v154 = vld [vmem:[#allocation5 + $0xf0] sm:$0xff]
    %v155 = vld [vmem:[#allocation5 + $0xf8] sm:$0xff]
    %v156 = vld [vmem:[#allocation5 + $0x100] sm:$0xff]
    %v157 = vld [vmem:[#allocation5 + $0x108] sm:$0xff]
    %v158 = vld [vmem:[#allocation5 + $0x110] sm:$0xff]
    %v159 = vld [vmem:[#allocation5 + $0x118] sm:$0xff]
    %v160 = vld [vmem:[#allocation5 + $0x120] sm:$0xff]
    %v161 = vld [vmem:[#allocation5 + $0x128] sm:$0xff]
    %v162 = vld [vmem:[#allocation5 + $0x130] sm:$0xff]
    %v163 = vld [vmem:[#allocation5 + $0x138] sm:$0xff]
    %v164 = vld [vmem:[#allocation5 + $0x140] sm:$0xff]
    %v165 = vld [vmem:[#allocation5 + $0x148] sm:$0xff]
    %v166 = vld [vmem:[#allocation5 + $0x150] sm:$0xff]
    %v167 = vld [vmem:[#allocation5 + $0x158] sm:$0xff]
    %v168 = vld [vmem:[#allocation5 + $0x160] sm:$0xff]
    %v169 = vld [vmem:[#allocation5 + $0x168] sm:$0xff]
    %v170 = vld [vmem:[#allocation5 + $0x170] sm:$0xff]
    %v171 = vld [vmem:[#allocation5 + $0x178] sm:$0xff]
    %v172 = vld [vmem:[#allocation5 + $0x180] sm:$0xff]
    %v173 = vld [vmem:[#allocation5 + $0x188] sm:$0xff]
    %v174 = vld [vmem:[#allocation5 + $0x190] sm:$0xff]
    %v175 = vld [vmem:[#allocation5 + $0x198] sm:$0xff]
    %v176 = vld [vmem:[#allocation5 + $0x1a0] sm:$0xff]
    %v177 = vld [vmem:[#allocation5 + $0x1a8] sm:$0xff]
    %v178 = vld [vmem:[#allocation5 + $0x1b0] sm:$0xff]
    %v179 = vld [vmem:[#allocation5 + $0x1b8] sm:$0xff]
    %v180 = vld [vmem:[#allocation5 + $0x1c0] sm:$0xff]
    %v181 = vld [vmem:[#allocation5 + $0x1c8] sm:$0xff]
    %v182 = vld [vmem:[#allocation5 + $0x1d0] sm:$0xff]
    %v183 = vld [vmem:[#allocation5 + $0x1d8] sm:$0xff]
    %v184 = vld [vmem:[#allocation5 + $0x1e0] sm:$0xff]
    %v185 = vld [vmem:[#allocation5 + $0x1e8] sm:$0xff]
    %v186 = vld [vmem:[#allocation5 + $0x1f0] sm:$0xff]
    %v187 = vld [vmem:[#allocation5 + $0x1f8] sm:$0xff]
    %v188 = vld [vmem:[#allocation5 + $0x200] sm:$0xff]
    %v189 = vld [vmem:[#allocation5 + $0x208] sm:$0xff]
    %v190 = vld [vmem:[#allocation5 + $0x210] sm:$0xff]
    %v191 = vld [vmem:[#allocation5 + $0x218] sm:$0xff]
    %v192 = vld [vmem:[#allocation5 + $0x220] sm:$0xff]
    %v193 = vld [vmem:[#allocation5 + $0x228] sm:$0xff]
    %v194 = vld [vmem:[#allocation5 + $0x230] sm:$0xff]
    %v195 = vld [vmem:[#allocation5 + $0x238] sm:$0xff]
    %v196 = vld [vmem:[#allocation5 + $0x240] sm:$0xff]
    %v197 = vld [vmem:[#allocation5 + $0x248] sm:$0xff]
    %v198 = vld [vmem:[#allocation5 + $0x250] sm:$0xff]
    %v199 = vld [vmem:[#allocation5 + $0x258] sm:$0xff]
    %v200 = vld [vmem:[#allocation5 + $0x260] sm:$0xff]
    %v201 = vld [vmem:[#allocation5 + $0x268] sm:$0xff]
    %v202 = vld [vmem:[#allocation5 + $0x270] sm:$0xff]
    %v203 = vld [vmem:[#allocation5 + $0x278] sm:$0xff]
    %v204 = vld [vmem:[#allocation5 + $0x280] sm:$0xff]
    %v205 = vld [vmem:[#allocation5 + $0x288] sm:$0xff]
    %v206 = vld [vmem:[#allocation5 + $0x290] sm:$0xff]
    %v207 = vld [vmem:[#allocation5 + $0x298] sm:$0xff]
    %v208 = vld [vmem:[#allocation5 + $0x2a0] sm:$0xff]
    %v209 = vld [vmem:[#allocation5 + $0x2a8] sm:$0xff]
    %v210 = vld [vmem:[#allocation5 + $0x2b0] sm:$0xff]
    %v211 = vld [vmem:[#allocation5 + $0x2b8] sm:$0xff]
    %v212 = vld [vmem:[#allocation5 + $0x2c0] sm:$0xff]
    %v213 = vld [vmem:[#allocation5 + $0x2c8] sm:$0xff]
    %v214 = vld [vmem:[#allocation5 + $0x2d0] sm:$0xff]
    %v215 = vld [vmem:[#allocation5 + $0x2d8] sm:$0xff]
    %v216 = vld [vmem:[#allocation5 + $0x2e0] sm:$0xff]
    %v217 = vld [vmem:[#allocation5 + $0x2e8] sm:$0xff]
    %v218 = vld [vmem:[#allocation5 + $0x2f0] sm:$0xff]
    %v219 = vld [vmem:[#allocation5 + $0x2f8] sm:$0xff]
    %v220 = vld [vmem:[#allocation5 + $0x300] sm:$0xff]
    %v221 = vld [vmem:[#allocation5 + $0x308] sm:$0xff]
    %v222 = vld [vmem:[#allocation5 + $0x310] sm:$0xff]
    %v223 = vld [vmem:[#allocation5 + $0x318] sm:$0xff]
    %v224 = vld [vmem:[#allocation5 + $0x320] sm:$0xff]
    %v225 = vld [vmem:[#allocation5 + $0x328] sm:$0xff]
    %v226 = vld [vmem:[#allocation5 + $0x330] sm:$0xff]
    %v227 = vld [vmem:[#allocation5 + $0x338] sm:$0xff]
    %v228 = vld [vmem:[#allocation5 + $0x340] sm:$0xff]
    %v229 = vld [vmem:[#allocation5 + $0x348] sm:$0xff]
    %v230 = vld [vmem:[#allocation5 + $0x350] sm:$0xff]
    %v231 = vld [vmem:[#allocation5 + $0x358] sm:$0xff]
    %v232 = vld [vmem:[#allocation5 + $0x360] sm:$0xff]
    %v233 = vld [vmem:[#allocation5 + $0x368] sm:$0xff]
    %v234 = vld [vmem:[#allocation5 + $0x370] sm:$0xff]
    %v235 = vld [vmem:[#allocation5 + $0x378] sm:$0xff]
    %v236 = vld [vmem:[#allocation5 + $0x380] sm:$0xff]
    %v237 = vld [vmem:[#allocation5 + $0x388] sm:$0xff]
    %v238 = vld [vmem:[#allocation5 + $0x390] sm:$0xff]
    %v239 = vld [vmem:[#allocation5 + $0x398] sm:$0xff]
    %v240 = vld [vmem:[#allocation5 + $0x3a0] sm:$0xff]
    %v241 = vld [vmem:[#allocation5 + $0x3a8] sm:$0xff]
    %v242 = vld [vmem:[#allocation5 + $0x3b0] sm:$0xff]
    %v243 = vld [vmem:[#allocation5 + $0x3b8] sm:$0xff]
    %v244 = vld [vmem:[#allocation5 + $0x3c0] sm:$0xff]
    %v245 = vld [vmem:[#allocation5 + $0x3c8] sm:$0xff]
    %v246 = vld [vmem:[#allocation5 + $0x3d0] sm:$0xff]
    %v247 = vld [vmem:[#allocation5 + $0x3d8] sm:$0xff]
    %v248 = vld [vmem:[#allocation5 + $0x3e0] sm:$0xff]
    %v249 = vld [vmem:[#allocation5 + $0x3e8] sm:$0xff]
    %v250 = vld [vmem:[#allocation5 + $0x3f0] sm:$0xff]
    %v251 = vld [vmem:[#allocation5 + $0x3f8] sm:$0xff]
    %v252 = vld [vmem:[#allocation5 + $0x400] sm:$0xff]
    %v253 = vld [vmem:[#allocation5 + $0x408] sm:$0xff]
    %v254 = vld [vmem:[#allocation5 + $0x410] sm:$0xff]
    %v255 = vld [vmem:[#allocation5 + $0x418] sm:$0xff]
    %v256 = vld [vmem:[#allocation5 + $0x420] sm:$0xff]
    %v257 = vld [vmem:[#allocation5 + $0x428] sm:$0xff]
    %v258 = vld [vmem:[#allocation5 + $0x430] sm:$0xff]
    %v259 = vld [vmem:[#allocation5 + $0x438] sm:$0xff]
    %v260 = vld [vmem:[#allocation5 + $0x440] sm:$0xff]
    %v261 = vld [vmem:[#allocation5 + $0x448] sm:$0xff]
    %v262 = vld [vmem:[#allocation5 + $0x450] sm:$0xff]
    %v263 = vld [vmem:[#allocation5 + $0x458] sm:$0xff]
    %v264 = vld [vmem:[#allocation5 + $0x460] sm:$0xff]
    %v265 = vld [vmem:[#allocation5 + $0x468] sm:$0xff]
    %v266 = vld [vmem:[#allocation5 + $0x470] sm:$0xff]
    %v267 = vld [vmem:[#allocation5 + $0x478] sm:$0xff]
    %v268 = vld [vmem:[#allocation5 + $0x480] sm:$0xff]
    %v269 = vld [vmem:[#allocation5 + $0x488] sm:$0xff]
    %v270 = vld [vmem:[#allocation5 + $0x490] sm:$0xff]
    %v271 = vld [vmem:[#allocation5 + $0x498] sm:$0xff]
    %v272 = vld [vmem:[#allocation5 + $0x4a0] sm:$0xff]
    %v273 = vld [vmem:[#allocation5 + $0x4a8] sm:$0xff]
    %v274 = vld [vmem:[#allocation5 + $0x4b0] sm:$0xff]
    %v275 = vld [vmem:[#allocation5 + $0x4b8] sm:$0xff]
    %v276 = vld [vmem:[#allocation5 + $0x4c0] sm:$0xff]
    %v277 = vld [vmem:[#allocation5 + $0x4c8] sm:$0xff]
    %v278 = vld [vmem:[#allocation5 + $0x4d0] sm:$0xff]
    %v279 = vld [vmem:[#allocation5 + $0x4d8] sm:$0xff]
    %v280 = vld [vmem:[#allocation5 + $0x4e0] sm:$0xff]
    %v281 = vld [vmem:[#allocation5 + $0x4e8] sm:$0xff]
    %v282 = vld [vmem:[#allocation5 + $0x4f0] sm:$0xff]
    %v283 = vld [vmem:[#allocation5 + $0x4f8] sm:$0xff]
    %v284 = vld [vmem:[#allocation5 + $0x500] sm:$0xff]
    %v285 = vld [vmem:[#allocation5 + $0x508] sm:$0xff]
    %v286 = vld [vmem:[#allocation5 + $0x510] sm:$0xff]
    %v287 = vld [vmem:[#allocation5 + $0x518] sm:$0xff]
    %v288 = vld [vmem:[#allocation5 + $0x520] sm:$0xff]
    %v289 = vld [vmem:[#allocation5 + $0x528] sm:$0xff]
    %v290 = vld [vmem:[#allocation5 + $0x530] sm:$0xff]
    %v291 = vld [vmem:[#allocation5 + $0x538] sm:$0xff]
    %v292 = vld [vmem:[#allocation5 + $0x540] sm:$0xff]
    %v293 = vld [vmem:[#allocation5 + $0x548] sm:$0xff]
    %v294 = vld [vmem:[#allocation5 + $0x550] sm:$0xff]
    %v295 = vld [vmem:[#allocation5 + $0x558] sm:$0xff]
    %v296 = vld [vmem:[#allocation5 + $0x560] sm:$0xff]
    %v297 = vld [vmem:[#allocation5 + $0x568] sm:$0xff]
    %v298 = vld [vmem:[#allocation5 + $0x570] sm:$0xff]
    %v299 = vld [vmem:[#allocation5 + $0x578] sm:$0xff]
    %v300 = vld [vmem:[#allocation5 + $0x580] sm:$0xff]
    %v301 = vld [vmem:[#allocation5 + $0x588] sm:$0xff]
    %v302 = vld [vmem:[#allocation5 + $0x590] sm:$0xff]
    %v303 = vld [vmem:[#allocation5 + $0x598] sm:$0xff]
    %v304 = vld [vmem:[#allocation5 + $0x5a0] sm:$0xff]
    %v305 = vld [vmem:[#allocation5 + $0x5a8] sm:$0xff]
    %v306 = vld [vmem:[#allocation5 + $0x5b0] sm:$0xff]
    %v307 = vld [vmem:[#allocation5 + $0x5b8] sm:$0xff]
    %v308 = vld [vmem:[#allocation5 + $0x5c0] sm:$0xff]
    %v309 = vld [vmem:[#allocation5 + $0x5c8] sm:$0xff]
    %v310 = vld [vmem:[#allocation5 + $0x5d0] sm:$0xff]
    %v311 = vld [vmem:[#allocation5 + $0x5d8] sm:$0xff]
    %v312 = vld [vmem:[#allocation5 + $0x5e0] sm:$0xff]
    %v313 = vld [vmem:[#allocation5 + $0x5e8] sm:$0xff]
    %v314 = vld [vmem:[#allocation5 + $0x5f0] sm:$0xff]
    %v315 = vld [vmem:[#allocation5 + $0x5f8] sm:$0xff]
    %v316 = vld [vmem:[#allocation5 + $0x600] sm:$0xff]
    %v317 = vld [vmem:[#allocation5 + $0x608] sm:$0xff]
    %v318 = vld [vmem:[#allocation5 + $0x610] sm:$0xff]
    %v319 = vld [vmem:[#allocation5 + $0x618] sm:$0xff]
    %v320 = vld [vmem:[#allocation5 + $0x620] sm:$0xff]
    %v321 = vld [vmem:[#allocation5 + $0x628] sm:$0xff]
    %v322 = vld [vmem:[#allocation5 + $0x630] sm:$0xff]
    %v323 = vld [vmem:[#allocation5 + $0x638] sm:$0xff]
    %v324 = vld [vmem:[#allocation5 + $0x640] sm:$0xff]
    %v325 = vld [vmem:[#allocation5 + $0x648] sm:$0xff]
    %v326 = vld [vmem:[#allocation5 + $0x650] sm:$0xff]
    %v327 = vld [vmem:[#allocation5 + $0x658] sm:$0xff]
    %v328 = vld [vmem:[#allocation5 + $0x660] sm:$0xff]
    %v329 = vld [vmem:[#allocation5 + $0x668] sm:$0xff]
    %v330 = vld [vmem:[#allocation5 + $0x670] sm:$0xff]
    %v331 = vld [vmem:[#allocation5 + $0x678] sm:$0xff]
    %v332 = vld [vmem:[#allocation5 + $0x680] sm:$0xff]
    %v333 = vld [vmem:[#allocation5 + $0x688] sm:$0xff]
    %v334 = vld [vmem:[#allocation5 + $0x690] sm:$0xff]
    %v335 = vld [vmem:[#allocation5 + $0x698] sm:$0xff]
    %v336 = vld [vmem:[#allocation5 + $0x6a0] sm:$0xff]
    %v337 = vld [vmem:[#allocation5 + $0x6a8] sm:$0xff]
    %v338 = vld [vmem:[#allocation5 + $0x6b0] sm:$0xff]
    %v339 = vld [vmem:[#allocation5 + $0x6b8] sm:$0xff]
    %v340 = vld [vmem:[#allocation5 + $0x6c0] sm:$0xff]
    %v341 = vld [vmem:[#allocation5 + $0x6c8] sm:$0xff]
    %v342 = vld [vmem:[#allocation5 + $0x6d0] sm:$0xff]
    %v343 = vld [vmem:[#allocation5 + $0x6d8] sm:$0xff]
    %v344 = vld [vmem:[#allocation5 + $0x6e0] sm:$0xff]
    %v345 = vld [vmem:[#allocation5 + $0x6e8] sm:$0xff]
    %v346 = vld [vmem:[#allocation5 + $0x6f0] sm:$0xff]
    %v347 = vld [vmem:[#allocation5 + $0x6f8] sm:$0xff]
    %v348 = vld [vmem:[#allocation5 + $0x700] sm:$0xff]
    %v349 = vld [vmem:[#allocation5 + $0x708] sm:$0xff]
    %v350 = vld [vmem:[#allocation5 + $0x710] sm:$0xff]
    %v351 = vld [vmem:[#allocation5 + $0x718] sm:$0xff]
    %v352 = vld [vmem:[#allocation5 + $0x720] sm:$0xff]
    %v353 = vld [vmem:[#allocation5 + $0x728] sm:$0xff]
    %v354 = vld [vmem:[#allocation5 + $0x730] sm:$0xff]
    %v355 = vld [vmem:[#allocation5 + $0x738] sm:$0xff]
    %v356 = vld [vmem:[#allocation5 + $0x740] sm:$0xff]
    %v357 = vld [vmem:[#allocation5 + $0x748] sm:$0xff]
    %v358 = vld [vmem:[#allocation5 + $0x750] sm:$0xff]
    %v359 = vld [vmem:[#allocation5 + $0x758] sm:$0xff]
    %v360 = vld [vmem:[#allocation5 + $0x760] sm:$0xff]
    %v361 = vld [vmem:[#allocation5 + $0x768] sm:$0xff]
    %v362 = vld [vmem:[#allocation5 + $0x770] sm:$0xff]
    %v363 = vld [vmem:[#allocation5 + $0x778] sm:$0xff]
    %v364 = vld [vmem:[#allocation5 + $0x780] sm:$0xff]
    %v365 = vld [vmem:[#allocation5 + $0x788] sm:$0xff]
    %v366 = vld [vmem:[#allocation5 + $0x790] sm:$0xff]
    %v367 = vld [vmem:[#allocation5 + $0x798] sm:$0xff]
    %v368 = vld [vmem:[#allocation5 + $0x7a0] sm:$0xff]
    %v369 = vld [vmem:[#allocation5 + $0x7a8] sm:$0xff]
    %v370 = vld [vmem:[#allocation5 + $0x7b0] sm:$0xff]
    %v371 = vld [vmem:[#allocation5 + $0x7b8] sm:$0xff]
    %v372 = vld [vmem:[#allocation5 + $0x7c0] sm:$0xff]
    %v373 = vld [vmem:[#allocation5 + $0x7c8] sm:$0xff]
    %v374 = vld [vmem:[#allocation5 + $0x7d0] sm:$0xff]
    %v375 = vld [vmem:[#allocation5 + $0x7d8] sm:$0xff]
    %v376 = vld [vmem:[#allocation5 + $0x7e0] sm:$0xff]
    %v377 = vld [vmem:[#allocation5 + $0x7e8] sm:$0xff]
    %v378 = vld [vmem:[#allocation5 + $0x7f0] sm:$0xff]
    %v379 = vld [vmem:[#allocation5 + $0x7f8] sm:$0xff]
    %v380 = vld [vmem:[#allocation7] sm:$0xf]
    %v382 = vperm.slane %v380, 0
    %v383 = vperm.slane %v380, 1
    %v384 = vperm.slane %v380, 2
    %v385 = vperm.slane %v380, 3
    %391 = vst [vmem:[#allocation1] ss:$9 sm:$0xff] %v123
    %v392 = vld [vmem:[#allocation1] sm:$0xff]
    %v393 = vld [vmem:[#allocation1 + $0x9] sm:$0xff]
    %v394 = vld [vmem:[#allocation1 + $0x12] sm:$0xff]
    %v395 = vld [vmem:[#allocation1 + $0x1b] sm:$0xff]
    %v396 = vld [vmem:[#allocation1 + $0x24] sm:$0xff]
    %v397 = vld [vmem:[#allocation1 + $0x2d] sm:$0xff]
    %v398 = vld [vmem:[#allocation1 + $0x36] sm:$0xff]
    %v399 = vld [vmem:[#allocation1 + $0x3f] sm:$0xff]
    %v664 = vunpack.c.l.b16 %v124
    %v665 = vunpack.c.h.b16 %v124
    %v666 = vunpack.c.l.b16 %v125
    %v667 = vunpack.c.h.b16 %v125
    %v668 = vunpack.c.l.b16 %v126
    %v669 = vunpack.c.h.b16 %v126
    %v670 = vunpack.c.l.b16 %v127
    %v671 = vunpack.c.h.b16 %v127
    %v672 = vunpack.c.l.b16 %v128
    %v673 = vunpack.c.h.b16 %v128
    %v674 = vunpack.c.l.b16 %v129
    %v675 = vunpack.c.h.b16 %v129
    %v676 = vunpack.c.l.b16 %v130
    %v677 = vunpack.c.h.b16 %v130
    %v678 = vunpack.c.l.b16 %v131
    %v679 = vunpack.c.h.b16 %v131
    %v680 = vunpack.c.l.b16 %v132
    %v681 = vunpack.c.h.b16 %v132
    %v682 = vunpack.c.l.b16 %v133
    %v683 = vunpack.c.h.b16 %v133
    %v684 = vunpack.c.l.b16 %v134
    %v685 = vunpack.c.h.b16 %v134
    %v686 = vunpack.c.l.b16 %v135
    %v687 = vunpack.c.h.b16 %v135
    %v688 = vunpack.c.l.b16 %v136
    %v689 = vunpack.c.h.b16 %v136
    %v690 = vunpack.c.l.b16 %v137
    %v691 = vunpack.c.h.b16 %v137
    %v692 = vunpack.c.l.b16 %v138
    %v693 = vunpack.c.h.b16 %v138
    %v694 = vunpack.c.l.b16 %v139
    %v695 = vunpack.c.h.b16 %v139
    %v696 = vunpack.c.l.b16 %v140
    %v697 = vunpack.c.h.b16 %v140
    %v698 = vunpack.c.l.b16 %v141
    %v699 = vunpack.c.h.b16 %v141
    %v700 = vunpack.c.l.b16 %v142
    %v701 = vunpack.c.h.b16 %v142
    %v702 = vunpack.c.l.b16 %v143
    %v703 = vunpack.c.h.b16 %v143
    %v704 = vunpack.c.l.b16 %v144
    %v705 = vunpack.c.h.b16 %v144
    %v706 = vunpack.c.l.b16 %v145
    %v707 = vunpack.c.h.b16 %v145
    %v708 = vunpack.c.l.b16 %v146
    %v709 = vunpack.c.h.b16 %v146
    %v710 = vunpack.c.l.b16 %v147
    %v711 = vunpack.c.h.b16 %v147
    %v712 = vunpack.c.l.b16 %v148
    %v713 = vunpack.c.h.b16 %v148
    %v714 = vunpack.c.l.b16 %v149
    %v715 = vunpack.c.h.b16 %v149
    %v716 = vunpack.c.l.b16 %v150
    %v717 = vunpack.c.h.b16 %v150
    %v718 = vunpack.c.l.b16 %v151
    %v719 = vunpack.c.h.b16 %v151
    %v720 = vunpack.c.l.b16 %v152
    %v721 = vunpack.c.h.b16 %v152
    %v722 = vunpack.c.l.b16 %v153
    %v723 = vunpack.c.h.b16 %v153
    %v724 = vunpack.c.l.b16 %v154
    %v725 = vunpack.c.h.b16 %v154
    %v726 = vunpack.c.l.b16 %v155
    %v727 = vunpack.c.h.b16 %v155
    %v728 = vunpack.c.l.b16 %v156
    %v729 = vunpack.c.h.b16 %v156
    %v730 = vunpack.c.l.b16 %v157
    %v731 = vunpack.c.h.b16 %v157
    %v732 = vunpack.c.l.b16 %v158
    %v733 = vunpack.c.h.b16 %v158
    %v734 = vunpack.c.l.b16 %v159
    %v735 = vunpack.c.h.b16 %v159
    %v736 = vunpack.c.l.b16 %v160
    %v737 = vunpack.c.h.b16 %v160
    %v738 = vunpack.c.l.b16 %v161
    %v739 = vunpack.c.h.b16 %v161
    %v740 = vunpack.c.l.b16 %v162
    %v741 = vunpack.c.h.b16 %v162
    %v742 = vunpack.c.l.b16 %v163
    %v743 = vunpack.c.h.b16 %v163
    %v744 = vunpack.c.l.b16 %v164
    %v745 = vunpack.c.h.b16 %v164
    %v746 = vunpack.c.l.b16 %v165
    %v747 = vunpack.c.h.b16 %v165
    %v748 = vunpack.c.l.b16 %v166
    %v749 = vunpack.c.h.b16 %v166
    %v750 = vunpack.c.l.b16 %v167
    %v751 = vunpack.c.h.b16 %v167
    %v752 = vunpack.c.l.b16 %v168
    %v753 = vunpack.c.h.b16 %v168
    %v754 = vunpack.c.l.b16 %v169
    %v755 = vunpack.c.h.b16 %v169
    %v756 = vunpack.c.l.b16 %v170
    %v757 = vunpack.c.h.b16 %v170
    %v758 = vunpack.c.l.b16 %v171
    %v759 = vunpack.c.h.b16 %v171
    %v760 = vunpack.c.l.b16 %v172
    %v761 = vunpack.c.h.b16 %v172
    %v762 = vunpack.c.l.b16 %v173
    %v763 = vunpack.c.h.b16 %v173
    %v764 = vunpack.c.l.b16 %v174
    %v765 = vunpack.c.h.b16 %v174
    %v766 = vunpack.c.l.b16 %v175
    %v767 = vunpack.c.h.b16 %v175
    %v768 = vunpack.c.l.b16 %v176
    %v769 = vunpack.c.h.b16 %v176
    %v770 = vunpack.c.l.b16 %v177
    %v771 = vunpack.c.h.b16 %v177
    %v772 = vunpack.c.l.b16 %v178
    %v773 = vunpack.c.h.b16 %v178
    %v774 = vunpack.c.l.b16 %v179
    %v775 = vunpack.c.h.b16 %v179
    %v776 = vunpack.c.l.b16 %v180
    %v777 = vunpack.c.h.b16 %v180
    %v778 = vunpack.c.l.b16 %v181
    %v779 = vunpack.c.h.b16 %v181
    %v780 = vunpack.c.l.b16 %v182
    %v781 = vunpack.c.h.b16 %v182
    %v782 = vunpack.c.l.b16 %v183
    %v783 = vunpack.c.h.b16 %v183
    %v784 = vunpack.c.l.b16 %v184
    %v785 = vunpack.c.h.b16 %v184
    %v786 = vunpack.c.l.b16 %v185
    %v787 = vunpack.c.h.b16 %v185
    %v788 = vunpack.c.l.b16 %v186
    %v789 = vunpack.c.h.b16 %v186
    %v790 = vunpack.c.l.b16 %v187
    %v791 = vunpack.c.h.b16 %v187
    %v792 = vunpack.c.l.b16 %v188
    %v793 = vunpack.c.h.b16 %v188
    %v794 = vunpack.c.l.b16 %v189
    %v795 = vunpack.c.h.b16 %v189
    %v796 = vunpack.c.l.b16 %v190
    %v797 = vunpack.c.h.b16 %v190
    %v798 = vunpack.c.l.b16 %v191
    %v799 = vunpack.c.h.b16 %v191
    %v800 = vunpack.c.l.b16 %v192
    %v801 = vunpack.c.h.b16 %v192
    %v802 = vunpack.c.l.b16 %v193
    %v803 = vunpack.c.h.b16 %v193
    %v804 = vunpack.c.l.b16 %v194
    %v805 = vunpack.c.h.b16 %v194
    %v806 = vunpack.c.l.b16 %v195
    %v807 = vunpack.c.h.b16 %v195
    %v808 = vunpack.c.l.b16 %v196
    %v809 = vunpack.c.h.b16 %v196
    %v810 = vunpack.c.l.b16 %v197
    %v811 = vunpack.c.h.b16 %v197
    %v812 = vunpack.c.l.b16 %v198
    %v813 = vunpack.c.h.b16 %v198
    %v814 = vunpack.c.l.b16 %v199
    %v815 = vunpack.c.h.b16 %v199
    %v816 = vunpack.c.l.b16 %v200
    %v817 = vunpack.c.h.b16 %v200
    %v818 = vunpack.c.l.b16 %v201
    %v819 = vunpack.c.h.b16 %v201
    %v820 = vunpack.c.l.b16 %v202
    %v821 = vunpack.c.h.b16 %v202
    %v822 = vunpack.c.l.b16 %v203
    %v823 = vunpack.c.h.b16 %v203
    %v824 = vunpack.c.l.b16 %v204
    %v825 = vunpack.c.h.b16 %v204
    %v826 = vunpack.c.l.b16 %v205
    %v827 = vunpack.c.h.b16 %v205
    %v828 = vunpack.c.l.b16 %v206
    %v829 = vunpack.c.h.b16 %v206
    %v830 = vunpack.c.l.b16 %v207
    %v831 = vunpack.c.h.b16 %v207
    %v832 = vunpack.c.l.b16 %v208
    %v833 = vunpack.c.h.b16 %v208
    %v834 = vunpack.c.l.b16 %v209
    %v835 = vunpack.c.h.b16 %v209
    %v836 = vunpack.c.l.b16 %v210
    %v837 = vunpack.c.h.b16 %v210
    %v838 = vunpack.c.l.b16 %v211
    %v839 = vunpack.c.h.b16 %v211
    %v840 = vunpack.c.l.b16 %v212
    %v841 = vunpack.c.h.b16 %v212
    %v842 = vunpack.c.l.b16 %v213
    %v843 = vunpack.c.h.b16 %v213
    %v844 = vunpack.c.l.b16 %v214
    %v845 = vunpack.c.h.b16 %v214
    %v846 = vunpack.c.l.b16 %v215
    %v847 = vunpack.c.h.b16 %v215
    %v848 = vunpack.c.l.b16 %v216
    %v849 = vunpack.c.h.b16 %v216
    %v850 = vunpack.c.l.b16 %v217
    %v851 = vunpack.c.h.b16 %v217
    %v852 = vunpack.c.l.b16 %v218
    %v853 = vunpack.c.h.b16 %v218
    %v854 = vunpack.c.l.b16 %v219
    %v855 = vunpack.c.h.b16 %v219
    %v856 = vunpack.c.l.b16 %v220
    %v857 = vunpack.c.h.b16 %v220
    %v858 = vunpack.c.l.b16 %v221
    %v859 = vunpack.c.h.b16 %v221
    %v860 = vunpack.c.l.b16 %v222
    %v861 = vunpack.c.h.b16 %v222
    %v862 = vunpack.c.l.b16 %v223
    %v863 = vunpack.c.h.b16 %v223
    %v864 = vunpack.c.l.b16 %v224
    %v865 = vunpack.c.h.b16 %v224
    %v866 = vunpack.c.l.b16 %v225
    %v867 = vunpack.c.h.b16 %v225
    %v868 = vunpack.c.l.b16 %v226
    %v869 = vunpack.c.h.b16 %v226
    %v870 = vunpack.c.l.b16 %v227
    %v871 = vunpack.c.h.b16 %v227
    %v872 = vunpack.c.l.b16 %v228
    %v873 = vunpack.c.h.b16 %v228
    %v874 = vunpack.c.l.b16 %v229
    %v875 = vunpack.c.h.b16 %v229
    %v876 = vunpack.c.l.b16 %v230
    %v877 = vunpack.c.h.b16 %v230
    %v878 = vunpack.c.l.b16 %v231
    %v879 = vunpack.c.h.b16 %v231
    %v880 = vunpack.c.l.b16 %v232
    %v881 = vunpack.c.h.b16 %v232
    %v882 = vunpack.c.l.b16 %v233
    %v883 = vunpack.c.h.b16 %v233
    %v884 = vunpack.c.l.b16 %v234
    %v885 = vunpack.c.h.b16 %v234
    %v886 = vunpack.c.l.b16 %v235
    %v887 = vunpack.c.h.b16 %v235
    %v888 = vunpack.c.l.b16 %v236
    %v889 = vunpack.c.h.b16 %v236
    %v890 = vunpack.c.l.b16 %v237
    %v891 = vunpack.c.h.b16 %v237
    %v892 = vunpack.c.l.b16 %v238
    %v893 = vunpack.c.h.b16 %v238
    %v894 = vunpack.c.l.b16 %v239
    %v895 = vunpack.c.h.b16 %v239
    %v896 = vunpack.c.l.b16 %v240
    %v897 = vunpack.c.h.b16 %v240
    %v898 = vunpack.c.l.b16 %v241
    %v899 = vunpack.c.h.b16 %v241
    %v900 = vunpack.c.l.b16 %v242
    %v901 = vunpack.c.h.b16 %v242
    %v902 = vunpack.c.l.b16 %v243
    %v903 = vunpack.c.h.b16 %v243
    %v904 = vunpack.c.l.b16 %v244
    %v905 = vunpack.c.h.b16 %v244
    %v906 = vunpack.c.l.b16 %v245
    %v907 = vunpack.c.h.b16 %v245
    %v908 = vunpack.c.l.b16 %v246
    %v909 = vunpack.c.h.b16 %v246
    %v910 = vunpack.c.l.b16 %v247
    %v911 = vunpack.c.h.b16 %v247
    %v912 = vunpack.c.l.b16 %v248
    %v913 = vunpack.c.h.b16 %v248
    %v914 = vunpack.c.l.b16 %v249
    %v915 = vunpack.c.h.b16 %v249
    %v916 = vunpack.c.l.b16 %v250
    %v917 = vunpack.c.h.b16 %v250
    %v918 = vunpack.c.l.b16 %v251
    %v919 = vunpack.c.h.b16 %v251
    %v920 = vunpack.c.l.b16 %v252
    %v921 = vunpack.c.h.b16 %v252
    %v922 = vunpack.c.l.b16 %v253
    %v923 = vunpack.c.h.b16 %v253
    %v924 = vunpack.c.l.b16 %v254
    %v925 = vunpack.c.h.b16 %v254
    %v926 = vunpack.c.l.b16 %v255
    %v927 = vunpack.c.h.b16 %v255
    %v928 = vunpack.c.l.b16 %v256
    %v929 = vunpack.c.h.b16 %v256
    %v930 = vunpack.c.l.b16 %v257
    %v931 = vunpack.c.h.b16 %v257
    %v932 = vunpack.c.l.b16 %v258
    %v933 = vunpack.c.h.b16 %v258
    %v934 = vunpack.c.l.b16 %v259
    %v935 = vunpack.c.h.b16 %v259
    %v936 = vunpack.c.l.b16 %v260
    %v937 = vunpack.c.h.b16 %v260
    %v938 = vunpack.c.l.b16 %v261
    %v939 = vunpack.c.h.b16 %v261
    %v940 = vunpack.c.l.b16 %v262
    %v941 = vunpack.c.h.b16 %v262
    %v942 = vunpack.c.l.b16 %v263
    %v943 = vunpack.c.h.b16 %v263
    %v944 = vunpack.c.l.b16 %v264
    %v945 = vunpack.c.h.b16 %v264
    %v946 = vunpack.c.l.b16 %v265
    %v947 = vunpack.c.h.b16 %v265
    %v948 = vunpack.c.l.b16 %v266
    %v949 = vunpack.c.h.b16 %v266
    %v950 = vunpack.c.l.b16 %v267
    %v951 = vunpack.c.h.b16 %v267
    %v952 = vunpack.c.l.b16 %v268
    %v953 = vunpack.c.h.b16 %v268
    %v954 = vunpack.c.l.b16 %v269
    %v955 = vunpack.c.h.b16 %v269
    %v956 = vunpack.c.l.b16 %v270
    %v957 = vunpack.c.h.b16 %v270
    %v958 = vunpack.c.l.b16 %v271
    %v959 = vunpack.c.h.b16 %v271
    %v960 = vunpack.c.l.b16 %v272
    %v961 = vunpack.c.h.b16 %v272
    %v962 = vunpack.c.l.b16 %v273
    %v963 = vunpack.c.h.b16 %v273
    %v964 = vunpack.c.l.b16 %v274
    %v965 = vunpack.c.h.b16 %v274
    %v966 = vunpack.c.l.b16 %v275
    %v967 = vunpack.c.h.b16 %v275
    %v968 = vunpack.c.l.b16 %v276
    %v969 = vunpack.c.h.b16 %v276
    %v970 = vunpack.c.l.b16 %v277
    %v971 = vunpack.c.h.b16 %v277
    %v972 = vunpack.c.l.b16 %v278
    %v973 = vunpack.c.h.b16 %v278
    %v974 = vunpack.c.l.b16 %v279
    %v975 = vunpack.c.h.b16 %v279
    %v976 = vunpack.c.l.b16 %v280
    %v977 = vunpack.c.h.b16 %v280
    %v978 = vunpack.c.l.b16 %v281
    %v979 = vunpack.c.h.b16 %v281
    %v980 = vunpack.c.l.b16 %v282
    %v981 = vunpack.c.h.b16 %v282
    %v982 = vunpack.c.l.b16 %v283
    %v983 = vunpack.c.h.b16 %v283
    %v984 = vunpack.c.l.b16 %v284
    %v985 = vunpack.c.h.b16 %v284
    %v986 = vunpack.c.l.b16 %v285
    %v987 = vunpack.c.h.b16 %v285
    %v988 = vunpack.c.l.b16 %v286
    %v989 = vunpack.c.h.b16 %v286
    %v990 = vunpack.c.l.b16 %v287
    %v991 = vunpack.c.h.b16 %v287
    %v992 = vunpack.c.l.b16 %v288
    %v993 = vunpack.c.h.b16 %v288
    %v994 = vunpack.c.l.b16 %v289
    %v995 = vunpack.c.h.b16 %v289
    %v996 = vunpack.c.l.b16 %v290
    %v997 = vunpack.c.h.b16 %v290
    %v998 = vunpack.c.l.b16 %v291
    %v999 = vunpack.c.h.b16 %v291
    %v1000 = vunpack.c.l.b16 %v292
    %v1001 = vunpack.c.h.b16 %v292
    %v1002 = vunpack.c.l.b16 %v293
    %v1003 = vunpack.c.h.b16 %v293
    %v1004 = vunpack.c.l.b16 %v294
    %v1005 = vunpack.c.h.b16 %v294
    %v1006 = vunpack.c.l.b16 %v295
    %v1007 = vunpack.c.h.b16 %v295
    %v1008 = vunpack.c.l.b16 %v296
    %v1009 = vunpack.c.h.b16 %v296
    %v1010 = vunpack.c.l.b16 %v297
    %v1011 = vunpack.c.h.b16 %v297
    %v1012 = vunpack.c.l.b16 %v298
    %v1013 = vunpack.c.h.b16 %v298
    %v1014 = vunpack.c.l.b16 %v299
    %v1015 = vunpack.c.h.b16 %v299
    %v1016 = vunpack.c.l.b16 %v300
    %v1017 = vunpack.c.h.b16 %v300
    %v1018 = vunpack.c.l.b16 %v301
    %v1019 = vunpack.c.h.b16 %v301
    %v1020 = vunpack.c.l.b16 %v302
    %v1021 = vunpack.c.h.b16 %v302
    %v1022 = vunpack.c.l.b16 %v303
    %v1023 = vunpack.c.h.b16 %v303
    %v1024 = vunpack.c.l.b16 %v304
    %v1025 = vunpack.c.h.b16 %v304
    %v1026 = vunpack.c.l.b16 %v305
    %v1027 = vunpack.c.h.b16 %v305
    %v1028 = vunpack.c.l.b16 %v306
    %v1029 = vunpack.c.h.b16 %v306
    %v1030 = vunpack.c.l.b16 %v307
    %v1031 = vunpack.c.h.b16 %v307
    %v1032 = vunpack.c.l.b16 %v308
    %v1033 = vunpack.c.h.b16 %v308
    %v1034 = vunpack.c.l.b16 %v309
    %v1035 = vunpack.c.h.b16 %v309
    %v1036 = vunpack.c.l.b16 %v310
    %v1037 = vunpack.c.h.b16 %v310
    %v1038 = vunpack.c.l.b16 %v311
    %v1039 = vunpack.c.h.b16 %v311
    %v1040 = vunpack.c.l.b16 %v312
    %v1041 = vunpack.c.h.b16 %v312
    %v1042 = vunpack.c.l.b16 %v313
    %v1043 = vunpack.c.h.b16 %v313
    %v1044 = vunpack.c.l.b16 %v314
    %v1045 = vunpack.c.h.b16 %v314
    %v1046 = vunpack.c.l.b16 %v315
    %v1047 = vunpack.c.h.b16 %v315
    %v1048 = vunpack.c.l.b16 %v316
    %v1049 = vunpack.c.h.b16 %v316
    %v1050 = vunpack.c.l.b16 %v317
    %v1051 = vunpack.c.h.b16 %v317
    %v1052 = vunpack.c.l.b16 %v318
    %v1053 = vunpack.c.h.b16 %v318
    %v1054 = vunpack.c.l.b16 %v319
    %v1055 = vunpack.c.h.b16 %v319
    %v1056 = vunpack.c.l.b16 %v320
    %v1057 = vunpack.c.h.b16 %v320
    %v1058 = vunpack.c.l.b16 %v321
    %v1059 = vunpack.c.h.b16 %v321
    %v1060 = vunpack.c.l.b16 %v322
    %v1061 = vunpack.c.h.b16 %v322
    %v1062 = vunpack.c.l.b16 %v323
    %v1063 = vunpack.c.h.b16 %v323
    %v1064 = vunpack.c.l.b16 %v324
    %v1065 = vunpack.c.h.b16 %v324
    %v1066 = vunpack.c.l.b16 %v325
    %v1067 = vunpack.c.h.b16 %v325
    %v1068 = vunpack.c.l.b16 %v326
    %v1069 = vunpack.c.h.b16 %v326
    %v1070 = vunpack.c.l.b16 %v327
    %v1071 = vunpack.c.h.b16 %v327
    %v1072 = vunpack.c.l.b16 %v328
    %v1073 = vunpack.c.h.b16 %v328
    %v1074 = vunpack.c.l.b16 %v329
    %v1075 = vunpack.c.h.b16 %v329
    %v1076 = vunpack.c.l.b16 %v330
    %v1077 = vunpack.c.h.b16 %v330
    %v1078 = vunpack.c.l.b16 %v331
    %v1079 = vunpack.c.h.b16 %v331
    %v1080 = vunpack.c.l.b16 %v332
    %v1081 = vunpack.c.h.b16 %v332
    %v1082 = vunpack.c.l.b16 %v333
    %v1083 = vunpack.c.h.b16 %v333
    %v1084 = vunpack.c.l.b16 %v334
    %v1085 = vunpack.c.h.b16 %v334
    %v1086 = vunpack.c.l.b16 %v335
    %v1087 = vunpack.c.h.b16 %v335
    %v1088 = vunpack.c.l.b16 %v336
    %v1089 = vunpack.c.h.b16 %v336
    %v1090 = vunpack.c.l.b16 %v337
    %v1091 = vunpack.c.h.b16 %v337
    %v1092 = vunpack.c.l.b16 %v338
    %v1093 = vunpack.c.h.b16 %v338
    %v1094 = vunpack.c.l.b16 %v339
    %v1095 = vunpack.c.h.b16 %v339
    %v1096 = vunpack.c.l.b16 %v340
    %v1097 = vunpack.c.h.b16 %v340
    %v1098 = vunpack.c.l.b16 %v341
    %v1099 = vunpack.c.h.b16 %v341
    %v1100 = vunpack.c.l.b16 %v342
    %v1101 = vunpack.c.h.b16 %v342
    %v1102 = vunpack.c.l.b16 %v343
    %v1103 = vunpack.c.h.b16 %v343
    %v1104 = vunpack.c.l.b16 %v344
    %v1105 = vunpack.c.h.b16 %v344
    %v1106 = vunpack.c.l.b16 %v345
    %v1107 = vunpack.c.h.b16 %v345
    %v1108 = vunpack.c.l.b16 %v346
    %v1109 = vunpack.c.h.b16 %v346
    %v1110 = vunpack.c.l.b16 %v347
    %v1111 = vunpack.c.h.b16 %v347
    %v1112 = vunpack.c.l.b16 %v348
    %v1113 = vunpack.c.h.b16 %v348
    %v1114 = vunpack.c.l.b16 %v349
    %v1115 = vunpack.c.h.b16 %v349
    %v1116 = vunpack.c.l.b16 %v350
    %v1117 = vunpack.c.h.b16 %v350
    %v1118 = vunpack.c.l.b16 %v351
    %v1119 = vunpack.c.h.b16 %v351
    %v1120 = vunpack.c.l.b16 %v352
    %v1121 = vunpack.c.h.b16 %v352
    %v1122 = vunpack.c.l.b16 %v353
    %v1123 = vunpack.c.h.b16 %v353
    %v1124 = vunpack.c.l.b16 %v354
    %v1125 = vunpack.c.h.b16 %v354
    %v1126 = vunpack.c.l.b16 %v355
    %v1127 = vunpack.c.h.b16 %v355
    %v1128 = vunpack.c.l.b16 %v356
    %v1129 = vunpack.c.h.b16 %v356
    %v1130 = vunpack.c.l.b16 %v357
    %v1131 = vunpack.c.h.b16 %v357
    %v1132 = vunpack.c.l.b16 %v358
    %v1133 = vunpack.c.h.b16 %v358
    %v1134 = vunpack.c.l.b16 %v359
    %v1135 = vunpack.c.h.b16 %v359
    %v1136 = vunpack.c.l.b16 %v360
    %v1137 = vunpack.c.h.b16 %v360
    %v1138 = vunpack.c.l.b16 %v361
    %v1139 = vunpack.c.h.b16 %v361
    %v1140 = vunpack.c.l.b16 %v362
    %v1141 = vunpack.c.h.b16 %v362
    %v1142 = vunpack.c.l.b16 %v363
    %v1143 = vunpack.c.h.b16 %v363
    %v1144 = vunpack.c.l.b16 %v364
    %v1145 = vunpack.c.h.b16 %v364
    %v1146 = vunpack.c.l.b16 %v365
    %v1147 = vunpack.c.h.b16 %v365
    %v1148 = vunpack.c.l.b16 %v366
    %v1149 = vunpack.c.h.b16 %v366
    %v1150 = vunpack.c.l.b16 %v367
    %v1151 = vunpack.c.h.b16 %v367
    %v1152 = vunpack.c.l.b16 %v368
    %v1153 = vunpack.c.h.b16 %v368
    %v1154 = vunpack.c.l.b16 %v369
    %v1155 = vunpack.c.h.b16 %v369
    %v1156 = vunpack.c.l.b16 %v370
    %v1157 = vunpack.c.h.b16 %v370
    %v1158 = vunpack.c.l.b16 %v371
    %v1159 = vunpack.c.h.b16 %v371
    %v1160 = vunpack.c.l.b16 %v372
    %v1161 = vunpack.c.h.b16 %v372
    %v1162 = vunpack.c.l.b16 %v373
    %v1163 = vunpack.c.h.b16 %v373
    %v1164 = vunpack.c.l.b16 %v374
    %v1165 = vunpack.c.h.b16 %v374
    %v1166 = vunpack.c.l.b16 %v375
    %v1167 = vunpack.c.h.b16 %v375
    %v1168 = vunpack.c.l.b16 %v376
    %v1169 = vunpack.c.h.b16 %v376
    %v1170 = vunpack.c.l.b16 %v377
    %v1171 = vunpack.c.h.b16 %v377
    %v1172 = vunpack.c.l.b16 %v378
    %v1173 = vunpack.c.h.b16 %v378
    %v1174 = vunpack.c.l.b16 %v379
    %v1175 = vunpack.c.h.b16 %v379
    %v1176 = vpack.c.b16 %v668, %v664
    %v1177 = vpack.c.b16 %v669, %v665
    %v1178 = vpack.c.b16 %v670, %v666
    %v1179 = vpack.c.b16 %v671, %v667
    %v1180 = vpack.c.b16 %v676, %v672
    %v1181 = vpack.c.b16 %v677, %v673
    %v1182 = vpack.c.b16 %v678, %v674
    %v1183 = vpack.c.b16 %v679, %v675
    %v1184 = vpack.c.b16 %v684, %v680
    %v1185 = vpack.c.b16 %v685, %v681
    %v1186 = vpack.c.b16 %v686, %v682
    %v1187 = vpack.c.b16 %v687, %v683
    %v1188 = vpack.c.b16 %v692, %v688
    %v1189 = vpack.c.b16 %v693, %v689
    %v1190 = vpack.c.b16 %v694, %v690
    %v1191 = vpack.c.b16 %v695, %v691
    %v1192 = vpack.c.b16 %v700, %v696
    %v1193 = vpack.c.b16 %v701, %v697
    %v1194 = vpack.c.b16 %v702, %v698
    %v1195 = vpack.c.b16 %v703, %v699
    %v1196 = vpack.c.b16 %v708, %v704
    %v1197 = vpack.c.b16 %v709, %v705
    %v1198 = vpack.c.b16 %v710, %v706
    %v1199 = vpack.c.b16 %v711, %v707
    %v1200 = vpack.c.b16 %v716, %v712
    %v1201 = vpack.c.b16 %v717, %v713
    %v1202 = vpack.c.b16 %v718, %v714
    %v1203 = vpack.c.b16 %v719, %v715
    %v1204 = vpack.c.b16 %v724, %v720
    %v1205 = vpack.c.b16 %v725, %v721
    %v1206 = vpack.c.b16 %v726, %v722
    %v1207 = vpack.c.b16 %v727, %v723
    %v1208 = vpack.c.b16 %v732, %v728
    %v1209 = vpack.c.b16 %v733, %v729
    %v1210 = vpack.c.b16 %v734, %v730
    %v1211 = vpack.c.b16 %v735, %v731
    %v1212 = vpack.c.b16 %v740, %v736
    %v1213 = vpack.c.b16 %v741, %v737
    %v1214 = vpack.c.b16 %v742, %v738
    %v1215 = vpack.c.b16 %v743, %v739
    %v1216 = vpack.c.b16 %v748, %v744
    %v1217 = vpack.c.b16 %v749, %v745
    %v1218 = vpack.c.b16 %v750, %v746
    %v1219 = vpack.c.b16 %v751, %v747
    %v1220 = vpack.c.b16 %v756, %v752
    %v1221 = vpack.c.b16 %v757, %v753
    %v1222 = vpack.c.b16 %v758, %v754
    %v1223 = vpack.c.b16 %v759, %v755
    %v1224 = vpack.c.b16 %v764, %v760
    %v1225 = vpack.c.b16 %v765, %v761
    %v1226 = vpack.c.b16 %v766, %v762
    %v1227 = vpack.c.b16 %v767, %v763
    %v1228 = vpack.c.b16 %v772, %v768
    %v1229 = vpack.c.b16 %v773, %v769
    %v1230 = vpack.c.b16 %v774, %v770
    %v1231 = vpack.c.b16 %v775, %v771
    %v1232 = vpack.c.b16 %v780, %v776
    %v1233 = vpack.c.b16 %v781, %v777
    %v1234 = vpack.c.b16 %v782, %v778
    %v1235 = vpack.c.b16 %v783, %v779
    %v1236 = vpack.c.b16 %v788, %v784
    %v1237 = vpack.c.b16 %v789, %v785
    %v1238 = vpack.c.b16 %v790, %v786
    %v1239 = vpack.c.b16 %v791, %v787
    %v1240 = vpack.c.b16 %v796, %v792
    %v1241 = vpack.c.b16 %v797, %v793
    %v1242 = vpack.c.b16 %v798, %v794
    %v1243 = vpack.c.b16 %v799, %v795
    %v1244 = vpack.c.b16 %v804, %v800
    %v1245 = vpack.c.b16 %v805, %v801
    %v1246 = vpack.c.b16 %v806, %v802
    %v1247 = vpack.c.b16 %v807, %v803
    %v1248 = vpack.c.b16 %v812, %v808
    %v1249 = vpack.c.b16 %v813, %v809
    %v1250 = vpack.c.b16 %v814, %v810
    %v1251 = vpack.c.b16 %v815, %v811
    %v1252 = vpack.c.b16 %v820, %v816
    %v1253 = vpack.c.b16 %v821, %v817
    %v1254 = vpack.c.b16 %v822, %v818
    %v1255 = vpack.c.b16 %v823, %v819
    %v1256 = vpack.c.b16 %v828, %v824
    %v1257 = vpack.c.b16 %v829, %v825
    %v1258 = vpack.c.b16 %v830, %v826
    %v1259 = vpack.c.b16 %v831, %v827
    %v1260 = vpack.c.b16 %v836, %v832
    %v1261 = vpack.c.b16 %v837, %v833
    %v1262 = vpack.c.b16 %v838, %v834
    %v1263 = vpack.c.b16 %v839, %v835
    %v1264 = vpack.c.b16 %v844, %v840
    %v1265 = vpack.c.b16 %v845, %v841
    %v1266 = vpack.c.b16 %v846, %v842
    %v1267 = vpack.c.b16 %v847, %v843
    %v1268 = vpack.c.b16 %v852, %v848
    %v1269 = vpack.c.b16 %v853, %v849
    %v1270 = vpack.c.b16 %v854, %v850
    %v1271 = vpack.c.b16 %v855, %v851
    %v1272 = vpack.c.b16 %v860, %v856
    %v1273 = vpack.c.b16 %v861, %v857
    %v1274 = vpack.c.b16 %v862, %v858
    %v1275 = vpack.c.b16 %v863, %v859
    %v1276 = vpack.c.b16 %v868, %v864
    %v1277 = vpack.c.b16 %v869, %v865
    %v1278 = vpack.c.b16 %v870, %v866
    %v1279 = vpack.c.b16 %v871, %v867
    %v1280 = vpack.c.b16 %v876, %v872
    %v1281 = vpack.c.b16 %v877, %v873
    %v1282 = vpack.c.b16 %v878, %v874
    %v1283 = vpack.c.b16 %v879, %v875
    %v1284 = vpack.c.b16 %v884, %v880
    %v1285 = vpack.c.b16 %v885, %v881
    %v1286 = vpack.c.b16 %v886, %v882
    %v1287 = vpack.c.b16 %v887, %v883
    %v1288 = vpack.c.b16 %v892, %v888
    %v1289 = vpack.c.b16 %v893, %v889
    %v1290 = vpack.c.b16 %v894, %v890
    %v1291 = vpack.c.b16 %v895, %v891
    %v1292 = vpack.c.b16 %v900, %v896
    %v1293 = vpack.c.b16 %v901, %v897
    %v1294 = vpack.c.b16 %v902, %v898
    %v1295 = vpack.c.b16 %v903, %v899
    %v1296 = vpack.c.b16 %v908, %v904
    %v1297 = vpack.c.b16 %v909, %v905
    %v1298 = vpack.c.b16 %v910, %v906
    %v1299 = vpack.c.b16 %v911, %v907
    %v1300 = vpack.c.b16 %v916, %v912
    %v1301 = vpack.c.b16 %v917, %v913
    %v1302 = vpack.c.b16 %v918, %v914
    %v1303 = vpack.c.b16 %v919, %v915
    %v1304 = vpack.c.b16 %v924, %v920
    %v1305 = vpack.c.b16 %v925, %v921
    %v1306 = vpack.c.b16 %v926, %v922
    %v1307 = vpack.c.b16 %v927, %v923
    %v1308 = vpack.c.b16 %v932, %v928
    %v1309 = vpack.c.b16 %v933, %v929
    %v1310 = vpack.c.b16 %v934, %v930
    %v1311 = vpack.c.b16 %v935, %v931
    %v1312 = vpack.c.b16 %v940, %v936
    %v1313 = vpack.c.b16 %v941, %v937
    %v1314 = vpack.c.b16 %v942, %v938
    %v1315 = vpack.c.b16 %v943, %v939
    %v1316 = vpack.c.b16 %v948, %v944
    %v1317 = vpack.c.b16 %v949, %v945
    %v1318 = vpack.c.b16 %v950, %v946
    %v1319 = vpack.c.b16 %v951, %v947
    %v1320 = vpack.c.b16 %v956, %v952
    %v1321 = vpack.c.b16 %v957, %v953
    %v1322 = vpack.c.b16 %v958, %v954
    %v1323 = vpack.c.b16 %v959, %v955
    %v1324 = vpack.c.b16 %v964, %v960
    %v1325 = vpack.c.b16 %v965, %v961
    %v1326 = vpack.c.b16 %v966, %v962
    %v1327 = vpack.c.b16 %v967, %v963
    %v1328 = vpack.c.b16 %v972, %v968
    %v1329 = vpack.c.b16 %v973, %v969
    %v1330 = vpack.c.b16 %v974, %v970
    %v1331 = vpack.c.b16 %v975, %v971
    %v1332 = vpack.c.b16 %v980, %v976
    %v1333 = vpack.c.b16 %v981, %v977
    %v1334 = vpack.c.b16 %v982, %v978
    %v1335 = vpack.c.b16 %v983, %v979
    %v1336 = vpack.c.b16 %v988, %v984
    %v1337 = vpack.c.b16 %v989, %v985
    %v1338 = vpack.c.b16 %v990, %v986
    %v1339 = vpack.c.b16 %v991, %v987
    %v1340 = vpack.c.b16 %v996, %v992
    %v1341 = vpack.c.b16 %v997, %v993
    %v1342 = vpack.c.b16 %v998, %v994
    %v1343 = vpack.c.b16 %v999, %v995
    %v1344 = vpack.c.b16 %v1004, %v1000
    %v1345 = vpack.c.b16 %v1005, %v1001
    %v1346 = vpack.c.b16 %v1006, %v1002
    %v1347 = vpack.c.b16 %v1007, %v1003
    %v1348 = vpack.c.b16 %v1012, %v1008
    %v1349 = vpack.c.b16 %v1013, %v1009
    %v1350 = vpack.c.b16 %v1014, %v1010
    %v1351 = vpack.c.b16 %v1015, %v1011
    %v1352 = vpack.c.b16 %v1020, %v1016
    %v1353 = vpack.c.b16 %v1021, %v1017
    %v1354 = vpack.c.b16 %v1022, %v1018
    %v1355 = vpack.c.b16 %v1023, %v1019
    %v1356 = vpack.c.b16 %v1028, %v1024
    %v1357 = vpack.c.b16 %v1029, %v1025
    %v1358 = vpack.c.b16 %v1030, %v1026
    %v1359 = vpack.c.b16 %v1031, %v1027
    %v1360 = vpack.c.b16 %v1036, %v1032
    %v1361 = vpack.c.b16 %v1037, %v1033
    %v1362 = vpack.c.b16 %v1038, %v1034
    %v1363 = vpack.c.b16 %v1039, %v1035
    %v1364 = vpack.c.b16 %v1044, %v1040
    %v1365 = vpack.c.b16 %v1045, %v1041
    %v1366 = vpack.c.b16 %v1046, %v1042
    %v1367 = vpack.c.b16 %v1047, %v1043
    %v1368 = vpack.c.b16 %v1052, %v1048
    %v1369 = vpack.c.b16 %v1053, %v1049
    %v1370 = vpack.c.b16 %v1054, %v1050
    %v1371 = vpack.c.b16 %v1055, %v1051
    %v1372 = vpack.c.b16 %v1060, %v1056
    %v1373 = vpack.c.b16 %v1061, %v1057
    %v1374 = vpack.c.b16 %v1062, %v1058
    %v1375 = vpack.c.b16 %v1063, %v1059
    %v1376 = vpack.c.b16 %v1068, %v1064
    %v1377 = vpack.c.b16 %v1069, %v1065
    %v1378 = vpack.c.b16 %v1070, %v1066
    %v1379 = vpack.c.b16 %v1071, %v1067
    %v1380 = vpack.c.b16 %v1076, %v1072
    %v1381 = vpack.c.b16 %v1077, %v1073
    %v1382 = vpack.c.b16 %v1078, %v1074
    %v1383 = vpack.c.b16 %v1079, %v1075
    %v1384 = vpack.c.b16 %v1084, %v1080
    %v1385 = vpack.c.b16 %v1085, %v1081
    %v1386 = vpack.c.b16 %v1086, %v1082
    %v1387 = vpack.c.b16 %v1087, %v1083
    %v1388 = vpack.c.b16 %v1092, %v1088
    %v1389 = vpack.c.b16 %v1093, %v1089
    %v1390 = vpack.c.b16 %v1094, %v1090
    %v1391 = vpack.c.b16 %v1095, %v1091
    %v1392 = vpack.c.b16 %v1100, %v1096
    %v1393 = vpack.c.b16 %v1101, %v1097
    %v1394 = vpack.c.b16 %v1102, %v1098
    %v1395 = vpack.c.b16 %v1103, %v1099
    %v1396 = vpack.c.b16 %v1108, %v1104
    %v1397 = vpack.c.b16 %v1109, %v1105
    %v1398 = vpack.c.b16 %v1110, %v1106
    %v1399 = vpack.c.b16 %v1111, %v1107
    %v1400 = vpack.c.b16 %v1116, %v1112
    %v1401 = vpack.c.b16 %v1117, %v1113
    %v1402 = vpack.c.b16 %v1118, %v1114
    %v1403 = vpack.c.b16 %v1119, %v1115
    %v1404 = vpack.c.b16 %v1124, %v1120
    %v1405 = vpack.c.b16 %v1125, %v1121
    %v1406 = vpack.c.b16 %v1126, %v1122
    %v1407 = vpack.c.b16 %v1127, %v1123
    %v1408 = vpack.c.b16 %v1132, %v1128
    %v1409 = vpack.c.b16 %v1133, %v1129
    %v1410 = vpack.c.b16 %v1134, %v1130
    %v1411 = vpack.c.b16 %v1135, %v1131
    %v1412 = vpack.c.b16 %v1140, %v1136
    %v1413 = vpack.c.b16 %v1141, %v1137
    %v1414 = vpack.c.b16 %v1142, %v1138
    %v1415 = vpack.c.b16 %v1143, %v1139
    %v1416 = vpack.c.b16 %v1148, %v1144
    %v1417 = vpack.c.b16 %v1149, %v1145
    %v1418 = vpack.c.b16 %v1150, %v1146
    %v1419 = vpack.c.b16 %v1151, %v1147
    %v1420 = vpack.c.b16 %v1156, %v1152
    %v1421 = vpack.c.b16 %v1157, %v1153
    %v1422 = vpack.c.b16 %v1158, %v1154
    %v1423 = vpack.c.b16 %v1159, %v1155
    %v1424 = vpack.c.b16 %v1164, %v1160
    %v1425 = vpack.c.b16 %v1165, %v1161
    %v1426 = vpack.c.b16 %v1166, %v1162
    %v1427 = vpack.c.b16 %v1167, %v1163
    %v1428 = vpack.c.b16 %v1172, %v1168
    %v1429 = vpack.c.b16 %v1173, %v1169
    %v1430 = vpack.c.b16 %v1174, %v1170
    %v1431 = vpack.c.b16 %v1175, %v1171
    %1688 = vmatpush.bf16.msra.mxu0 %v1204
    %1689 = vmatpush.bf16.msra.mxu0 %v1200
    %1690 = vmatpush.bf16.msra.mxu0 %v1196
    %1691 = vmatpush.bf16.msra.mxu0 %v1192
    %1692 = vmatpush.bf16.msra.mxu0 %v1188
    %1693 = vmatpush.bf16.msra.mxu0 %v1184
    %1694 = vmatpush.bf16.msra.mxu0 %v1180
    %1695 = vmatpush.bf16.msra.mxu0 %v1176
    %1696 = vmatmul.bf16.gmra.mxu0 %v392
    %v1697 = vpop.f32.mrf.mxu0
    %v1698 = vadd.f32 %v382, %v1697
    %v1699 = vpop.f32.mrf.mxu0
    %1700 = vdwg.mxu0
    %1701 = vmatpush.bf16.msra.mxu0 %v1236
    %1702 = vmatpush.bf16.msra.mxu0 %v1232
    %1703 = vmatpush.bf16.msra.mxu0 %v1228
    %1704 = vmatpush.bf16.msra.mxu0 %v1224
    %1705 = vmatpush.bf16.msra.mxu0 %v1220
    %1706 = vmatpush.bf16.msra.mxu0 %v1216
    %1707 = vmatpush.bf16.msra.mxu0 %v1212
    %1708 = vmatpush.bf16.msra.mxu0 %v1208
    %1709 = vmatmul.bf16.gmra.mxu0 %v393
    %v1710 = vpop.f32.mrf.mxu0
    %v1711 = vadd.f32 %v1698, %v1710
    %v1712 = vpop.f32.mrf.mxu0
    %1713 = vdwg.mxu0
    %1714 = vmatpush.bf16.msra.mxu0 %v1268
    %1715 = vmatpush.bf16.msra.mxu0 %v1264
    %1716 = vmatpush.bf16.msra.mxu0 %v1260
    %1717 = vmatpush.bf16.msra.mxu0 %v1256
    %1718 = vmatpush.bf16.msra.mxu0 %v1252
    %1719 = vmatpush.bf16.msra.mxu0 %v1248
    %1720 = vmatpush.bf16.msra.mxu0 %v1244
    %1721 = vmatpush.bf16.msra.mxu0 %v1240
    %1722 = vmatmul.bf16.gmra.mxu0 %v394
    %v1723 = vpop.f32.mrf.mxu0
    %v1724 = vadd.f32 %v1711, %v1723
    %v1725 = vpop.f32.mrf.mxu0
    %1726 = vdwg.mxu0
    %1727 = vmatpush.bf16.msra.mxu0 %v1300
    %1728 = vmatpush.bf16.msra.mxu0 %v1296
    %1729 = vmatpush.bf16.msra.mxu0 %v1292
    %1730 = vmatpush.bf16.msra.mxu0 %v1288
    %1731 = vmatpush.bf16.msra.mxu0 %v1284
    %1732 = vmatpush.bf16.msra.mxu0 %v1280
    %1733 = vmatpush.bf16.msra.mxu0 %v1276
    %1734 = vmatpush.bf16.msra.mxu0 %v1272
    %1735 = vmatmul.bf16.gmra.mxu0 %v395
    %v1736 = vpop.f32.mrf.mxu0
    %v1737 = vadd.f32 %v1724, %v1736
    %v1738 = vpop.f32.mrf.mxu0
    %1739 = vdwg.mxu0
    %1740 = vmatpush.bf16.msra.mxu0 %v1332
    %1741 = vmatpush.bf16.msra.mxu0 %v1328
    %1742 = vmatpush.bf16.msra.mxu0 %v1324
    %1743 = vmatpush.bf16.msra.mxu0 %v1320
    %1744 = vmatpush.bf16.msra.mxu0 %v1316
    %1745 = vmatpush.bf16.msra.mxu0 %v1312
    %1746 = vmatpush.bf16.msra.mxu0 %v1308
    %1747 = vmatpush.bf16.msra.mxu0 %v1304
    %1748 = vmatmul.bf16.gmra.mxu0 %v396
    %v1749 = vpop.f32.mrf.mxu0
    %v1750 = vadd.f32 %v1737, %v1749
    %v1751 = vpop.f32.mrf.mxu0
    %1752 = vdwg.mxu0
    %1753 = vmatpush.bf16.msra.mxu0 %v1364
    %1754 = vmatpush.bf16.msra.mxu0 %v1360
    %1755 = vmatpush.bf16.msra.mxu0 %v1356
    %1756 = vmatpush.bf16.msra.mxu0 %v1352
    %1757 = vmatpush.bf16.msra.mxu0 %v1348
    %1758 = vmatpush.bf16.msra.mxu0 %v1344
    %1759 = vmatpush.bf16.msra.mxu0 %v1340
    %1760 = vmatpush.bf16.msra.mxu0 %v1336
    %1761 = vmatmul.bf16.gmra.mxu0 %v397
    %v1762 = vpop.f32.mrf.mxu0
    %v1763 = vadd.f32 %v1750, %v1762
    %v1764 = vpop.f32.mrf.mxu0
    %1765 = vdwg.mxu0
    %1766 = vmatpush.bf16.msra.mxu0 %v1396
    %1767 = vmatpush.bf16.msra.mxu0 %v1392
    %1768 = vmatpush.bf16.msra.mxu0 %v1388
    %1769 = vmatpush.bf16.msra.mxu0 %v1384
    %1770 = vmatpush.bf16.msra.mxu0 %v1380
    %1771 = vmatpush.bf16.msra.mxu0 %v1376
    %1772 = vmatpush.bf16.msra.mxu0 %v1372
    %1773 = vmatpush.bf16.msra.mxu0 %v1368
    %1774 = vmatmul.bf16.gmra.mxu0 %v398
    %v1775 = vpop.f32.mrf.mxu0
    %v1776 = vadd.f32 %v1763, %v1775
    %v1777 = vpop.f32.mrf.mxu0
    %1778 = vdwg.mxu0
    %1779 = vmatpush.bf16.msra.mxu0 %v1428
    %1780 = vmatpush.bf16.msra.mxu0 %v1424
    %1781 = vmatpush.bf16.msra.mxu0 %v1420
    %1782 = vmatpush.bf16.msra.mxu0 %v1416
    %1783 = vmatpush.bf16.msra.mxu0 %v1412
    %1784 = vmatpush.bf16.msra.mxu0 %v1408
    %1785 = vmatpush.bf16.msra.mxu0 %v1404
    %1786 = vmatpush.bf16.msra.mxu0 %v1400
    %1787 = vmatmul.bf16.gmra.mxu0 %v399
    %v1788 = vpop.f32.mrf.mxu0
    %v1789 = vadd.f32 %v1776, %v1788
    %v1790 = vpop.f32.mrf.mxu0
    %1791 = vdwg.mxu0
    %1792 = vmatpush.bf16.msra.mxu0 %v1205
    %1793 = vmatpush.bf16.msra.mxu0 %v1201
    %1794 = vmatpush.bf16.msra.mxu0 %v1197
    %1795 = vmatpush.bf16.msra.mxu0 %v1193
    %1796 = vmatpush.bf16.msra.mxu0 %v1189
    %1797 = vmatpush.bf16.msra.mxu0 %v1185
    %1798 = vmatpush.bf16.msra.mxu0 %v1181
    %1799 = vmatpush.bf16.msra.mxu0 %v1177
    %1800 = vmatmul.bf16.gmra.mxu0 %v392
    %v1801 = vpop.f32.mrf.mxu0
    %v1802 = vadd.f32 %v383, %v1801
    %v1803 = vpop.f32.mrf.mxu0
    %1804 = vdwg.mxu0
    %1805 = vmatpush.bf16.msra.mxu0 %v1237
    %1806 = vmatpush.bf16.msra.mxu0 %v1233
    %1807 = vmatpush.bf16.msra.mxu0 %v1229
    %1808 = vmatpush.bf16.msra.mxu0 %v1225
    %1809 = vmatpush.bf16.msra.mxu0 %v1221
    %1810 = vmatpush.bf16.msra.mxu0 %v1217
    %1811 = vmatpush.bf16.msra.mxu0 %v1213
    %1812 = vmatpush.bf16.msra.mxu0 %v1209
    %1813 = vmatmul.bf16.gmra.mxu0 %v393
    %v1814 = vpop.f32.mrf.mxu0
    %v1815 = vadd.f32 %v1802, %v1814
    %v1816 = vpop.f32.mrf.mxu0
    %1817 = vdwg.mxu0
    %1818 = vmatpush.bf16.msra.mxu0 %v1269
    %1819 = vmatpush.bf16.msra.mxu0 %v1265
    %1820 = vmatpush.bf16.msra.mxu0 %v1261
    %1821 = vmatpush.bf16.msra.mxu0 %v1257
    %1822 = vmatpush.bf16.msra.mxu0 %v1253
    %1823 = vmatpush.bf16.msra.mxu0 %v1249
    %1824 = vmatpush.bf16.msra.mxu0 %v1245
    %1825 = vmatpush.bf16.msra.mxu0 %v1241
    %1826 = vmatmul.bf16.gmra.mxu0 %v394
    %v1827 = vpop.f32.mrf.mxu0
    %v1828 = vadd.f32 %v1815, %v1827
    %v1829 = vpop.f32.mrf.mxu0
    %1830 = vdwg.mxu0
    %1831 = vmatpush.bf16.msra.mxu0 %v1301
    %1832 = vmatpush.bf16.msra.mxu0 %v1297
    %1833 = vmatpush.bf16.msra.mxu0 %v1293
    %1834 = vmatpush.bf16.msra.mxu0 %v1289
    %1835 = vmatpush.bf16.msra.mxu0 %v1285
    %1836 = vmatpush.bf16.msra.mxu0 %v1281
    %1837 = vmatpush.bf16.msra.mxu0 %v1277
    %1838 = vmatpush.bf16.msra.mxu0 %v1273
    %1839 = vmatmul.bf16.gmra.mxu0 %v395
    %v1840 = vpop.f32.mrf.mxu0
    %v1841 = vadd.f32 %v1828, %v1840
    %v1842 = vpop.f32.mrf.mxu0
    %1843 = vdwg.mxu0
    %1844 = vmatpush.bf16.msra.mxu0 %v1333
    %1845 = vmatpush.bf16.msra.mxu0 %v1329
    %1846 = vmatpush.bf16.msra.mxu0 %v1325
    %1847 = vmatpush.bf16.msra.mxu0 %v1321
    %1848 = vmatpush.bf16.msra.mxu0 %v1317
    %1849 = vmatpush.bf16.msra.mxu0 %v1313
    %1850 = vmatpush.bf16.msra.mxu0 %v1309
    %1851 = vmatpush.bf16.msra.mxu0 %v1305
    %1852 = vmatmul.bf16.gmra.mxu0 %v396
    %v1853 = vpop.f32.mrf.mxu0
    %v1854 = vadd.f32 %v1841, %v1853
    %v1855 = vpop.f32.mrf.mxu0
    %1856 = vdwg.mxu0
    %1857 = vmatpush.bf16.msra.mxu0 %v1365
    %1858 = vmatpush.bf16.msra.mxu0 %v1361
    %1859 = vmatpush.bf16.msra.mxu0 %v1357
    %1860 = vmatpush.bf16.msra.mxu0 %v1353
    %1861 = vmatpush.bf16.msra.mxu0 %v1349
    %1862 = vmatpush.bf16.msra.mxu0 %v1345
    %1863 = vmatpush.bf16.msra.mxu0 %v1341
    %1864 = vmatpush.bf16.msra.mxu0 %v1337
    %1865 = vmatmul.bf16.gmra.mxu0 %v397
    %v1866 = vpop.f32.mrf.mxu0
    %v1867 = vadd.f32 %v1854, %v1866
    %v1868 = vpop.f32.mrf.mxu0
    %1869 = vdwg.mxu0
    %1870 = vmatpush.bf16.msra.mxu0 %v1397
    %1871 = vmatpush.bf16.msra.mxu0 %v1393
    %1872 = vmatpush.bf16.msra.mxu0 %v1389
    %1873 = vmatpush.bf16.msra.mxu0 %v1385
    %1874 = vmatpush.bf16.msra.mxu0 %v1381
    %1875 = vmatpush.bf16.msra.mxu0 %v1377
    %1876 = vmatpush.bf16.msra.mxu0 %v1373
    %1877 = vmatpush.bf16.msra.mxu0 %v1369
    %1878 = vmatmul.bf16.gmra.mxu0 %v398
    %v1879 = vpop.f32.mrf.mxu0
    %v1880 = vadd.f32 %v1867, %v1879
    %v1881 = vpop.f32.mrf.mxu0
    %1882 = vdwg.mxu0
    %1883 = vmatpush.bf16.msra.mxu0 %v1429
    %1884 = vmatpush.bf16.msra.mxu0 %v1425
    %1885 = vmatpush.bf16.msra.mxu0 %v1421
    %1886 = vmatpush.bf16.msra.mxu0 %v1417
    %1887 = vmatpush.bf16.msra.mxu0 %v1413
    %1888 = vmatpush.bf16.msra.mxu0 %v1409
    %1889 = vmatpush.bf16.msra.mxu0 %v1405
    %1890 = vmatpush.bf16.msra.mxu0 %v1401
    %1891 = vmatmul.bf16.gmra.mxu0 %v399
    %v1892 = vpop.f32.mrf.mxu0
    %v1893 = vadd.f32 %v1880, %v1892
    %v1894 = vpop.f32.mrf.mxu0
    %1895 = vdwg.mxu0
    %1896 = vmatpush.bf16.msra.mxu0 %v1206
    %1897 = vmatpush.bf16.msra.mxu0 %v1202
    %1898 = vmatpush.bf16.msra.mxu0 %v1198
    %1899 = vmatpush.bf16.msra.mxu0 %v1194
    %1900 = vmatpush.bf16.msra.mxu0 %v1190
    %1901 = vmatpush.bf16.msra.mxu0 %v1186
    %1902 = vmatpush.bf16.msra.mxu0 %v1182
    %1903 = vmatpush.bf16.msra.mxu0 %v1178
    %1904 = vmatmul.bf16.gmra.mxu0 %v392
    %v1905 = vpop.f32.mrf.mxu0
    %v1906 = vadd.f32 %v384, %v1905
    %v1907 = vpop.f32.mrf.mxu0
    %1908 = vdwg.mxu0
    %1909 = vmatpush.bf16.msra.mxu0 %v1238
    %1910 = vmatpush.bf16.msra.mxu0 %v1234
    %1911 = vmatpush.bf16.msra.mxu0 %v1230
    %1912 = vmatpush.bf16.msra.mxu0 %v1226
    %1913 = vmatpush.bf16.msra.mxu0 %v1222
    %1914 = vmatpush.bf16.msra.mxu0 %v1218
    %1915 = vmatpush.bf16.msra.mxu0 %v1214
    %1916 = vmatpush.bf16.msra.mxu0 %v1210
    %1917 = vmatmul.bf16.gmra.mxu0 %v393
    %v1918 = vpop.f32.mrf.mxu0
    %v1919 = vadd.f32 %v1906, %v1918
    %v1920 = vpop.f32.mrf.mxu0
    %1921 = vdwg.mxu0
    %1922 = vmatpush.bf16.msra.mxu0 %v1270
    %1923 = vmatpush.bf16.msra.mxu0 %v1266
    %1924 = vmatpush.bf16.msra.mxu0 %v1262
    %1925 = vmatpush.bf16.msra.mxu0 %v1258
    %1926 = vmatpush.bf16.msra.mxu0 %v1254
    %1927 = vmatpush.bf16.msra.mxu0 %v1250
    %1928 = vmatpush.bf16.msra.mxu0 %v1246
    %1929 = vmatpush.bf16.msra.mxu0 %v1242
    %1930 = vmatmul.bf16.gmra.mxu0 %v394
    %v1931 = vpop.f32.mrf.mxu0
    %v1932 = vadd.f32 %v1919, %v1931
    %v1933 = vpop.f32.mrf.mxu0
    %1934 = vdwg.mxu0
    %1935 = vmatpush.bf16.msra.mxu0 %v1302
    %1936 = vmatpush.bf16.msra.mxu0 %v1298
    %1937 = vmatpush.bf16.msra.mxu0 %v1294
    %1938 = vmatpush.bf16.msra.mxu0 %v1290
    %1939 = vmatpush.bf16.msra.mxu0 %v1286
    %1940 = vmatpush.bf16.msra.mxu0 %v1282
    %1941 = vmatpush.bf16.msra.mxu0 %v1278
    %1942 = vmatpush.bf16.msra.mxu0 %v1274
    %1943 = vmatmul.bf16.gmra.mxu0 %v395
    %v1944 = vpop.f32.mrf.mxu0
    %v1945 = vadd.f32 %v1932, %v1944
    %v1946 = vpop.f32.mrf.mxu0
    %1947 = vdwg.mxu0
    %1948 = vmatpush.bf16.msra.mxu0 %v1334
    %1949 = vmatpush.bf16.msra.mxu0 %v1330
    %1950 = vmatpush.bf16.msra.mxu0 %v1326
    %1951 = vmatpush.bf16.msra.mxu0 %v1322
    %1952 = vmatpush.bf16.msra.mxu0 %v1318
    %1953 = vmatpush.bf16.msra.mxu0 %v1314
    %1954 = vmatpush.bf16.msra.mxu0 %v1310
    %1955 = vmatpush.bf16.msra.mxu0 %v1306
    %1956 = vmatmul.bf16.gmra.mxu0 %v396
    %v1957 = vpop.f32.mrf.mxu0
    %v1958 = vadd.f32 %v1945, %v1957
    %v1959 = vpop.f32.mrf.mxu0
    %1960 = vdwg.mxu0
    %1961 = vmatpush.bf16.msra.mxu0 %v1366
    %1962 = vmatpush.bf16.msra.mxu0 %v1362
    %1963 = vmatpush.bf16.msra.mxu0 %v1358
    %1964 = vmatpush.bf16.msra.mxu0 %v1354
    %1965 = vmatpush.bf16.msra.mxu0 %v1350
    %1966 = vmatpush.bf16.msra.mxu0 %v1346
    %1967 = vmatpush.bf16.msra.mxu0 %v1342
    %1968 = vmatpush.bf16.msra.mxu0 %v1338
    %1969 = vmatmul.bf16.gmra.mxu0 %v397
    %v1970 = vpop.f32.mrf.mxu0
    %v1971 = vadd.f32 %v1958, %v1970
    %v1972 = vpop.f32.mrf.mxu0
    %1973 = vdwg.mxu0
    %1974 = vmatpush.bf16.msra.mxu0 %v1398
    %1975 = vmatpush.bf16.msra.mxu0 %v1394
    %1976 = vmatpush.bf16.msra.mxu0 %v1390
    %1977 = vmatpush.bf16.msra.mxu0 %v1386
    %1978 = vmatpush.bf16.msra.mxu0 %v1382
    %1979 = vmatpush.bf16.msra.mxu0 %v1378
    %1980 = vmatpush.bf16.msra.mxu0 %v1374
    %1981 = vmatpush.bf16.msra.mxu0 %v1370
    %1982 = vmatmul.bf16.gmra.mxu0 %v398
    %v1983 = vpop.f32.mrf.mxu0
    %v1984 = vadd.f32 %v1971, %v1983
    %v1985 = vpop.f32.mrf.mxu0
    %1986 = vdwg.mxu0
    %1987 = vmatpush.bf16.msra.mxu0 %v1430
    %1988 = vmatpush.bf16.msra.mxu0 %v1426
    %1989 = vmatpush.bf16.msra.mxu0 %v1422
    %1990 = vmatpush.bf16.msra.mxu0 %v1418
    %1991 = vmatpush.bf16.msra.mxu0 %v1414
    %1992 = vmatpush.bf16.msra.mxu0 %v1410
    %1993 = vmatpush.bf16.msra.mxu0 %v1406
    %1994 = vmatpush.bf16.msra.mxu0 %v1402
    %1995 = vmatmul.bf16.gmra.mxu0 %v399
    %v1996 = vpop.f32.mrf.mxu0
    %v1997 = vadd.f32 %v1984, %v1996
    %v1998 = vpop.f32.mrf.mxu0
    %1999 = vdwg.mxu0
    %2000 = vmatpush.bf16.msra.mxu0 %v1207
    %2001 = vmatpush.bf16.msra.mxu0 %v1203
    %2002 = vmatpush.bf16.msra.mxu0 %v1199
    %2003 = vmatpush.bf16.msra.mxu0 %v1195
    %2004 = vmatpush.bf16.msra.mxu0 %v1191
    %2005 = vmatpush.bf16.msra.mxu0 %v1187
    %2006 = vmatpush.bf16.msra.mxu0 %v1183
    %2007 = vmatpush.bf16.msra.mxu0 %v1179
    %2008 = vmatmul.bf16.gmra.mxu0 %v392
    %v2009 = vpop.f32.mrf.mxu0
    %v2010 = vadd.f32 %v385, %v2009
    %v2011 = vpop.f32.mrf.mxu0
    %2012 = vdwg.mxu0
    %2013 = vmatpush.bf16.msra.mxu0 %v1239
    %2014 = vmatpush.bf16.msra.mxu0 %v1235
    %2015 = vmatpush.bf16.msra.mxu0 %v1231
    %2016 = vmatpush.bf16.msra.mxu0 %v1227
    %2017 = vmatpush.bf16.msra.mxu0 %v1223
    %2018 = vmatpush.bf16.msra.mxu0 %v1219
    %2019 = vmatpush.bf16.msra.mxu0 %v1215
    %2020 = vmatpush.bf16.msra.mxu0 %v1211
    %2021 = vmatmul.bf16.gmra.mxu0 %v393
    %v2022 = vpop.f32.mrf.mxu0
    %v2023 = vadd.f32 %v2010, %v2022
    %v2024 = vpop.f32.mrf.mxu0
    %2025 = vdwg.mxu0
    %2026 = vmatpush.bf16.msra.mxu0 %v1271
    %2027 = vmatpush.bf16.msra.mxu0 %v1267
    %2028 = vmatpush.bf16.msra.mxu0 %v1263
    %2029 = vmatpush.bf16.msra.mxu0 %v1259
    %2030 = vmatpush.bf16.msra.mxu0 %v1255
    %2031 = vmatpush.bf16.msra.mxu0 %v1251
    %2032 = vmatpush.bf16.msra.mxu0 %v1247
    %2033 = vmatpush.bf16.msra.mxu0 %v1243
    %2034 = vmatmul.bf16.gmra.mxu0 %v394
    %v2035 = vpop.f32.mrf.mxu0
    %v2036 = vadd.f32 %v2023, %v2035
    %v2037 = vpop.f32.mrf.mxu0
    %2038 = vdwg.mxu0
    %2039 = vmatpush.bf16.msra.mxu0 %v1303
    %2040 = vmatpush.bf16.msra.mxu0 %v1299
    %2041 = vmatpush.bf16.msra.mxu0 %v1295
    %2042 = vmatpush.bf16.msra.mxu0 %v1291
    %2043 = vmatpush.bf16.msra.mxu0 %v1287
    %2044 = vmatpush.bf16.msra.mxu0 %v1283
    %2045 = vmatpush.bf16.msra.mxu0 %v1279
    %2046 = vmatpush.bf16.msra.mxu0 %v1275
    %2047 = vmatmul.bf16.gmra.mxu0 %v395
    %v2048 = vpop.f32.mrf.mxu0
    %v2049 = vadd.f32 %v2036, %v2048
    %v2050 = vpop.f32.mrf.mxu0
    %2051 = vdwg.mxu0
    %2052 = vmatpush.bf16.msra.mxu0 %v1335
    %2053 = vmatpush.bf16.msra.mxu0 %v1331
    %2054 = vmatpush.bf16.msra.mxu0 %v1327
    %2055 = vmatpush.bf16.msra.mxu0 %v1323
    %2056 = vmatpush.bf16.msra.mxu0 %v1319
    %2057 = vmatpush.bf16.msra.mxu0 %v1315
    %2058 = vmatpush.bf16.msra.mxu0 %v1311
    %2059 = vmatpush.bf16.msra.mxu0 %v1307
    %2060 = vmatmul.bf16.gmra.mxu0 %v396
    %v2061 = vpop.f32.mrf.mxu0
    %v2062 = vadd.f32 %v2049, %v2061
    %v2063 = vpop.f32.mrf.mxu0
    %2064 = vdwg.mxu0
    %2065 = vmatpush.bf16.msra.mxu0 %v1367
    %2066 = vmatpush.bf16.msra.mxu0 %v1363
    %2067 = vmatpush.bf16.msra.mxu0 %v1359
    %2068 = vmatpush.bf16.msra.mxu0 %v1355
    %2069 = vmatpush.bf16.msra.mxu0 %v1351
    %2070 = vmatpush.bf16.msra.mxu0 %v1347
    %2071 = vmatpush.bf16.msra.mxu0 %v1343
    %2072 = vmatpush.bf16.msra.mxu0 %v1339
    %2073 = vmatmul.bf16.gmra.mxu0 %v397
    %v2074 = vpop.f32.mrf.mxu0
    %v2075 = vadd.f32 %v2062, %v2074
    %v2076 = vpop.f32.mrf.mxu0
    %2077 = vdwg.mxu0
    %2078 = vmatpush.bf16.msra.mxu0 %v1399
    %2079 = vmatpush.bf16.msra.mxu0 %v1395
    %2080 = vmatpush.bf16.msra.mxu0 %v1391
    %2081 = vmatpush.bf16.msra.mxu0 %v1387
    %2082 = vmatpush.bf16.msra.mxu0 %v1383
    %2083 = vmatpush.bf16.msra.mxu0 %v1379
    %2084 = vmatpush.bf16.msra.mxu0 %v1375
    %2085 = vmatpush.bf16.msra.mxu0 %v1371
    %2086 = vmatmul.bf16.gmra.mxu0 %v398
    %v2087 = vpop.f32.mrf.mxu0
    %v2088 = vadd.f32 %v2075, %v2087
    %v2089 = vpop.f32.mrf.mxu0
    %2090 = vdwg.mxu0
    %2091 = vmatpush.bf16.msra.mxu0 %v1431
    %2092 = vmatpush.bf16.msra.mxu0 %v1427
    %2093 = vmatpush.bf16.msra.mxu0 %v1423
    %2094 = vmatpush.bf16.msra.mxu0 %v1419
    %2095 = vmatpush.bf16.msra.mxu0 %v1415
    %2096 = vmatpush.bf16.msra.mxu0 %v1411
    %2097 = vmatpush.bf16.msra.mxu0 %v1407
    %2098 = vmatpush.bf16.msra.mxu0 %v1403
    %2099 = vmatmul.bf16.gmra.mxu0 %v399
    %v2100 = vpop.f32.mrf.mxu0
    %v2101 = vadd.f32 %v2088, %v2100
    %v2102 = vpop.f32.mrf.mxu0
    %2103 = vdwg.mxu0
    %v2104 = vmul.f32 %v1789, 0.2
    %v2105 = vmul.f32 %v1893, 0.2
    %v2106 = vmul.f32 %v1997, 0.2
    %v2107 = vmul.f32 %v2101, 0.2
    %v2108 = vmax.f32 %v1789, %v2104
    %v2109 = vmax.f32 %v1893, %v2105
    %v2110 = vmax.f32 %v1997, %v2106
    %v2111 = vmax.f32 %v2101, %v2107
    %v2112 = vpack.c.bf16 %v2108, %v2108
    %v2113 = vpack.c.bf16 %v2109, %v2109
    %v2114 = vpack.c.bf16 %v2110, %v2110
    %v2115 = vpack.c.bf16 %v2111, %v2111
    %v2116 = vld [vmem:[#allocation8] sm:$0xff]
    %v2117 = vld [vmem:[#allocation8 + $0x8] sm:$0xff]
    %v2118 = vld [vmem:[#allocation8 + $0x10] sm:$0xff]
    %v2119 = vld [vmem:[#allocation8 + $0x18] sm:$0xff]
    %v2120 = vld [vmem:[#allocation8 + $0x20] sm:$0xff]
    %v2121 = vld [vmem:[#allocation8 + $0x28] sm:$0xff]
    %v2122 = vld [vmem:[#allocation8 + $0x30] sm:$0xff]
    %v2123 = vld [vmem:[#allocation8 + $0x38] sm:$0xff]
    %v2124 = vld [vmem:[#allocation8 + $0x40] sm:$0xff]
    %v2125 = vld [vmem:[#allocation8 + $0x48] sm:$0xff]
    %v2126 = vld [vmem:[#allocation8 + $0x50] sm:$0xff]
    %v2127 = vld [vmem:[#allocation8 + $0x58] sm:$0xff]
    %v2128 = vld [vmem:[#allocation8 + $0x60] sm:$0xff]
    %v2129 = vld [vmem:[#allocation8 + $0x68] sm:$0xff]
    %v2130 = vld [vmem:[#allocation8 + $0x70] sm:$0xff]
    %v2131 = vld [vmem:[#allocation8 + $0x78] sm:$0xff]
    %v2132 = vld [vmem:[#allocation8 + $0x80] sm:$0xff]
    %v2133 = vld [vmem:[#allocation8 + $0x88] sm:$0xff]
    %v2134 = vld [vmem:[#allocation8 + $0x90] sm:$0xff]
    %v2135 = vld [vmem:[#allocation8 + $0x98] sm:$0xff]
    %v2136 = vld [vmem:[#allocation8 + $0xa0] sm:$0xff]
    %v2137 = vld [vmem:[#allocation8 + $0xa8] sm:$0xff]
    %v2138 = vld [vmem:[#allocation8 + $0xb0] sm:$0xff]
    %v2139 = vld [vmem:[#allocation8 + $0xb8] sm:$0xff]
    %v2140 = vld [vmem:[#allocation8 + $0xc0] sm:$0xff]
    %v2141 = vld [vmem:[#allocation8 + $0xc8] sm:$0xff]
    %v2142 = vld [vmem:[#allocation8 + $0xd0] sm:$0xff]
    %v2143 = vld [vmem:[#allocation8 + $0xd8] sm:$0xff]
    %v2144 = vld [vmem:[#allocation8 + $0xe0] sm:$0xff]
    %v2145 = vld [vmem:[#allocation8 + $0xe8] sm:$0xff]
    %v2146 = vld [vmem:[#allocation8 + $0xf0] sm:$0xff]
    %v2147 = vld [vmem:[#allocation8 + $0xf8] sm:$0xff]
    %v2148 = vld [vmem:[#allocation8 + $0x100] sm:$0xff]
    %v2149 = vld [vmem:[#allocation8 + $0x108] sm:$0xff]
    %v2150 = vld [vmem:[#allocation8 + $0x110] sm:$0xff]
    %v2151 = vld [vmem:[#allocation8 + $0x118] sm:$0xff]
    %v2152 = vld [vmem:[#allocation8 + $0x120] sm:$0xff]
    %v2153 = vld [vmem:[#allocation8 + $0x128] sm:$0xff]
    %v2154 = vld [vmem:[#allocation8 + $0x130] sm:$0xff]
    %v2155 = vld [vmem:[#allocation8 + $0x138] sm:$0xff]
    %v2156 = vld [vmem:[#allocation8 + $0x140] sm:$0xff]
    %v2157 = vld [vmem:[#allocation8 + $0x148] sm:$0xff]
    %v2158 = vld [vmem:[#allocation8 + $0x150] sm:$0xff]
    %v2159 = vld [vmem:[#allocation8 + $0x158] sm:$0xff]
    %v2160 = vld [vmem:[#allocation8 + $0x160] sm:$0xff]
    %v2161 = vld [vmem:[#allocation8 + $0x168] sm:$0xff]
    %v2162 = vld [vmem:[#allocation8 + $0x170] sm:$0xff]
    %v2163 = vld [vmem:[#allocation8 + $0x178] sm:$0xff]
    %v2164 = vld [vmem:[#allocation8 + $0x180] sm:$0xff]
    %v2165 = vld [vmem:[#allocation8 + $0x188] sm:$0xff]
    %v2166 = vld [vmem:[#allocation8 + $0x190] sm:$0xff]
    %v2167 = vld [vmem:[#allocation8 + $0x198] sm:$0xff]
    %v2168 = vld [vmem:[#allocation8 + $0x1a0] sm:$0xff]
    %v2169 = vld [vmem:[#allocation8 + $0x1a8] sm:$0xff]
    %v2170 = vld [vmem:[#allocation8 + $0x1b0] sm:$0xff]
    %v2171 = vld [vmem:[#allocation8 + $0x1b8] sm:$0xff]
    %v2172 = vld [vmem:[#allocation8 + $0x1c0] sm:$0xff]
    %v2173 = vld [vmem:[#allocation8 + $0x1c8] sm:$0xff]
    %v2174 = vld [vmem:[#allocation8 + $0x1d0] sm:$0xff]
    %v2175 = vld [vmem:[#allocation8 + $0x1d8] sm:$0xff]
    %v2176 = vld [vmem:[#allocation8 + $0x1e0] sm:$0xff]
    %v2177 = vld [vmem:[#allocation8 + $0x1e8] sm:$0xff]
    %v2178 = vld [vmem:[#allocation8 + $0x1f0] sm:$0xff]
    %v2179 = vld [vmem:[#allocation8 + $0x1f8] sm:$0xff]
    %v2180 = vld [vmem:[%s4] sm:$0x3]
    %v2182 = vperm.slane %v2180, 0
    %v2183 = vperm.slane %v2180, 1
    %v2250 = vunpack.c.l.b16 %v2116
    %v2251 = vunpack.c.h.b16 %v2116
    %v2252 = vunpack.c.l.b16 %v2117
    %v2253 = vunpack.c.h.b16 %v2117
    %v2254 = vunpack.c.l.b16 %v2118
    %v2255 = vunpack.c.h.b16 %v2118
    %v2256 = vunpack.c.l.b16 %v2119
    %v2257 = vunpack.c.h.b16 %v2119
    %v2258 = vunpack.c.l.b16 %v2120
    %v2259 = vunpack.c.h.b16 %v2120
    %v2260 = vunpack.c.l.b16 %v2121
    %v2261 = vunpack.c.h.b16 %v2121
    %v2262 = vunpack.c.l.b16 %v2122
    %v2263 = vunpack.c.h.b16 %v2122
    %v2264 = vunpack.c.l.b16 %v2123
    %v2265 = vunpack.c.h.b16 %v2123
    %v2266 = vunpack.c.l.b16 %v2124
    %v2267 = vunpack.c.h.b16 %v2124
    %v2268 = vunpack.c.l.b16 %v2125
    %v2269 = vunpack.c.h.b16 %v2125
    %v2270 = vunpack.c.l.b16 %v2126
    %v2271 = vunpack.c.h.b16 %v2126
    %v2272 = vunpack.c.l.b16 %v2127
    %v2273 = vunpack.c.h.b16 %v2127
    %v2274 = vunpack.c.l.b16 %v2128
    %v2275 = vunpack.c.h.b16 %v2128
    %v2276 = vunpack.c.l.b16 %v2129
    %v2277 = vunpack.c.h.b16 %v2129
    %v2278 = vunpack.c.l.b16 %v2130
    %v2279 = vunpack.c.h.b16 %v2130
    %v2280 = vunpack.c.l.b16 %v2131
    %v2281 = vunpack.c.h.b16 %v2131
    %v2282 = vunpack.c.l.b16 %v2132
    %v2283 = vunpack.c.h.b16 %v2132
    %v2284 = vunpack.c.l.b16 %v2133
    %v2285 = vunpack.c.h.b16 %v2133
    %v2286 = vunpack.c.l.b16 %v2134
    %v2287 = vunpack.c.h.b16 %v2134
    %v2288 = vunpack.c.l.b16 %v2135
    %v2289 = vunpack.c.h.b16 %v2135
    %v2290 = vunpack.c.l.b16 %v2136
    %v2291 = vunpack.c.h.b16 %v2136
    %v2292 = vunpack.c.l.b16 %v2137
    %v2293 = vunpack.c.h.b16 %v2137
    %v2294 = vunpack.c.l.b16 %v2138
    %v2295 = vunpack.c.h.b16 %v2138
    %v2296 = vunpack.c.l.b16 %v2139
    %v2297 = vunpack.c.h.b16 %v2139
    %v2298 = vunpack.c.l.b16 %v2140
    %v2299 = vunpack.c.h.b16 %v2140
    %v2300 = vunpack.c.l.b16 %v2141
    %v2301 = vunpack.c.h.b16 %v2141
    %v2302 = vunpack.c.l.b16 %v2142
    %v2303 = vunpack.c.h.b16 %v2142
    %v2304 = vunpack.c.l.b16 %v2143
    %v2305 = vunpack.c.h.b16 %v2143
    %v2306 = vunpack.c.l.b16 %v2144
    %v2307 = vunpack.c.h.b16 %v2144
    %v2308 = vunpack.c.l.b16 %v2145
    %v2309 = vunpack.c.h.b16 %v2145
    %v2310 = vunpack.c.l.b16 %v2146
    %v2311 = vunpack.c.h.b16 %v2146
    %v2312 = vunpack.c.l.b16 %v2147
    %v2313 = vunpack.c.h.b16 %v2147
    %v2314 = vunpack.c.l.b16 %v2148
    %v2315 = vunpack.c.h.b16 %v2148
    %v2316 = vunpack.c.l.b16 %v2149
    %v2317 = vunpack.c.h.b16 %v2149
    %v2318 = vunpack.c.l.b16 %v2150
    %v2319 = vunpack.c.h.b16 %v2150
    %v2320 = vunpack.c.l.b16 %v2151
    %v2321 = vunpack.c.h.b16 %v2151
    %v2322 = vunpack.c.l.b16 %v2152
    %v2323 = vunpack.c.h.b16 %v2152
    %v2324 = vunpack.c.l.b16 %v2153
    %v2325 = vunpack.c.h.b16 %v2153
    %v2326 = vunpack.c.l.b16 %v2154
    %v2327 = vunpack.c.h.b16 %v2154
    %v2328 = vunpack.c.l.b16 %v2155
    %v2329 = vunpack.c.h.b16 %v2155
    %v2330 = vunpack.c.l.b16 %v2156
    %v2331 = vunpack.c.h.b16 %v2156
    %v2332 = vunpack.c.l.b16 %v2157
    %v2333 = vunpack.c.h.b16 %v2157
    %v2334 = vunpack.c.l.b16 %v2158
    %v2335 = vunpack.c.h.b16 %v2158
    %v2336 = vunpack.c.l.b16 %v2159
    %v2337 = vunpack.c.h.b16 %v2159
    %v2338 = vunpack.c.l.b16 %v2160
    %v2339 = vunpack.c.h.b16 %v2160
    %v2340 = vunpack.c.l.b16 %v2161
    %v2341 = vunpack.c.h.b16 %v2161
    %v2342 = vunpack.c.l.b16 %v2162
    %v2343 = vunpack.c.h.b16 %v2162
    %v2344 = vunpack.c.l.b16 %v2163
    %v2345 = vunpack.c.h.b16 %v2163
    %v2346 = vunpack.c.l.b16 %v2164
    %v2347 = vunpack.c.h.b16 %v2164
    %v2348 = vunpack.c.l.b16 %v2165
    %v2349 = vunpack.c.h.b16 %v2165
    %v2350 = vunpack.c.l.b16 %v2166
    %v2351 = vunpack.c.h.b16 %v2166
    %v2352 = vunpack.c.l.b16 %v2167
    %v2353 = vunpack.c.h.b16 %v2167
    %v2354 = vunpack.c.l.b16 %v2168
    %v2355 = vunpack.c.h.b16 %v2168
    %v2356 = vunpack.c.l.b16 %v2169
    %v2357 = vunpack.c.h.b16 %v2169
    %v2358 = vunpack.c.l.b16 %v2170
    %v2359 = vunpack.c.h.b16 %v2170
    %v2360 = vunpack.c.l.b16 %v2171
    %v2361 = vunpack.c.h.b16 %v2171
    %v2362 = vunpack.c.l.b16 %v2172
    %v2363 = vunpack.c.h.b16 %v2172
    %v2364 = vunpack.c.l.b16 %v2173
    %v2365 = vunpack.c.h.b16 %v2173
    %v2366 = vunpack.c.l.b16 %v2174
    %v2367 = vunpack.c.h.b16 %v2174
    %v2368 = vunpack.c.l.b16 %v2175
    %v2369 = vunpack.c.h.b16 %v2175
    %v2370 = vunpack.c.l.b16 %v2176
    %v2371 = vunpack.c.h.b16 %v2176
    %v2372 = vunpack.c.l.b16 %v2177
    %v2373 = vunpack.c.h.b16 %v2177
    %v2374 = vunpack.c.l.b16 %v2178
    %v2375 = vunpack.c.h.b16 %v2178
    %v2376 = vunpack.c.l.b16 %v2179
    %v2377 = vunpack.c.h.b16 %v2179
    %v2378 = vpack.c.b16 %v2252, %v2250
    %v2379 = vpack.c.b16 %v2253, %v2251
    %v2380 = vpack.c.b16 %v2256, %v2254
    %v2381 = vpack.c.b16 %v2257, %v2255
    %v2382 = vpack.c.b16 %v2260, %v2258
    %v2383 = vpack.c.b16 %v2261, %v2259
    %v2384 = vpack.c.b16 %v2264, %v2262
    %v2385 = vpack.c.b16 %v2265, %v2263
    %v2386 = vpack.c.b16 %v2268, %v2266
    %v2387 = vpack.c.b16 %v2269, %v2267
    %v2388 = vpack.c.b16 %v2272, %v2270
    %v2389 = vpack.c.b16 %v2273, %v2271
    %v2390 = vpack.c.b16 %v2276, %v2274
    %v2391 = vpack.c.b16 %v2277, %v2275
    %v2392 = vpack.c.b16 %v2280, %v2278
    %v2393 = vpack.c.b16 %v2281, %v2279
    %v2394 = vpack.c.b16 %v2284, %v2282
    %v2395 = vpack.c.b16 %v2285, %v2283
    %v2396 = vpack.c.b16 %v2288, %v2286
    %v2397 = vpack.c.b16 %v2289, %v2287
    %v2398 = vpack.c.b16 %v2292, %v2290
    %v2399 = vpack.c.b16 %v2293, %v2291
    %v2400 = vpack.c.b16 %v2296, %v2294
    %v2401 = vpack.c.b16 %v2297, %v2295
    %v2402 = vpack.c.b16 %v2300, %v2298
    %v2403 = vpack.c.b16 %v2301, %v2299
    %v2404 = vpack.c.b16 %v2304, %v2302
    %v2405 = vpack.c.b16 %v2305, %v2303
    %v2406 = vpack.c.b16 %v2308, %v2306
    %v2407 = vpack.c.b16 %v2309, %v2307
    %v2408 = vpack.c.b16 %v2312, %v2310
    %v2409 = vpack.c.b16 %v2313, %v2311
    %v2410 = vpack.c.b16 %v2316, %v2314
    %v2411 = vpack.c.b16 %v2317, %v2315
    %v2412 = vpack.c.b16 %v2320, %v2318
    %v2413 = vpack.c.b16 %v2321, %v2319
    %v2414 = vpack.c.b16 %v2324, %v2322
    %v2415 = vpack.c.b16 %v2325, %v2323
    %v2416 = vpack.c.b16 %v2328, %v2326
    %v2417 = vpack.c.b16 %v2329, %v2327
    %v2418 = vpack.c.b16 %v2332, %v2330
    %v2419 = vpack.c.b16 %v2333, %v2331
    %v2420 = vpack.c.b16 %v2336, %v2334
    %v2421 = vpack.c.b16 %v2337, %v2335
    %v2422 = vpack.c.b16 %v2340, %v2338
    %v2423 = vpack.c.b16 %v2341, %v2339
    %v2424 = vpack.c.b16 %v2344, %v2342
    %v2425 = vpack.c.b16 %v2345, %v2343
    %v2426 = vpack.c.b16 %v2348, %v2346
    %v2427 = vpack.c.b16 %v2349, %v2347
    %v2428 = vpack.c.b16 %v2352, %v2350
    %v2429 = vpack.c.b16 %v2353, %v2351
    %v2430 = vpack.c.b16 %v2356, %v2354
    %v2431 = vpack.c.b16 %v2357, %v2355
    %v2432 = vpack.c.b16 %v2360, %v2358
    %v2433 = vpack.c.b16 %v2361, %v2359
    %v2434 = vpack.c.b16 %v2364, %v2362
    %v2435 = vpack.c.b16 %v2365, %v2363
    %v2436 = vpack.c.b16 %v2368, %v2366
    %v2437 = vpack.c.b16 %v2369, %v2367
    %v2438 = vpack.c.b16 %v2372, %v2370
    %v2439 = vpack.c.b16 %v2373, %v2371
    %v2440 = vpack.c.b16 %v2376, %v2374
    %v2441 = vpack.c.b16 %v2377, %v2375
    %2506 = vmatpush.bf16.msra.mxu0 %v2392
    %2507 = vmatpush.bf16.msra.mxu0 %v2390
    %2508 = vmatpush.bf16.msra.mxu0 %v2388
    %2509 = vmatpush.bf16.msra.mxu0 %v2386
    %2510 = vmatpush.bf16.msra.mxu0 %v2384
    %2511 = vmatpush.bf16.msra.mxu0 %v2382
    %2512 = vmatpush.bf16.msra.mxu0 %v2380
    %2513 = vmatpush.bf16.msra.mxu0 %v2378
    %2514 = vmatmul.bf16.gmra.mxu0 %v2112
    %v2515 = vpop.f32.mrf.mxu0
    %v2516 = vadd.f32 %v2182, %v2515
    %v2517 = vpop.f32.mrf.mxu0
    %2518 = vdwg.mxu0
    %2519 = vmatpush.bf16.msra.mxu0 %v2408
    %2520 = vmatpush.bf16.msra.mxu0 %v2406
    %2521 = vmatpush.bf16.msra.mxu0 %v2404
    %2522 = vmatpush.bf16.msra.mxu0 %v2402
    %2523 = vmatpush.bf16.msra.mxu0 %v2400
    %2524 = vmatpush.bf16.msra.mxu0 %v2398
    %2525 = vmatpush.bf16.msra.mxu0 %v2396
    %2526 = vmatpush.bf16.msra.mxu0 %v2394
    %2527 = vmatmul.bf16.gmra.mxu0 %v2113
    %v2528 = vpop.f32.mrf.mxu0
    %v2529 = vadd.f32 %v2516, %v2528
    %v2530 = vpop.f32.mrf.mxu0
    %2531 = vdwg.mxu0
    %2532 = vmatpush.bf16.msra.mxu0 %v2424
    %2533 = vmatpush.bf16.msra.mxu0 %v2422
    %2534 = vmatpush.bf16.msra.mxu0 %v2420
    %2535 = vmatpush.bf16.msra.mxu0 %v2418
    %2536 = vmatpush.bf16.msra.mxu0 %v2416
    %2537 = vmatpush.bf16.msra.mxu0 %v2414
    %2538 = vmatpush.bf16.msra.mxu0 %v2412
    %2539 = vmatpush.bf16.msra.mxu0 %v2410
    %2540 = vmatmul.bf16.gmra.mxu0 %v2114
    %v2541 = vpop.f32.mrf.mxu0
    %v2542 = vadd.f32 %v2529, %v2541
    %v2543 = vpop.f32.mrf.mxu0
    %2544 = vdwg.mxu0
    %2545 = vmatpush.bf16.msra.mxu0 %v2440
    %2546 = vmatpush.bf16.msra.mxu0 %v2438
    %2547 = vmatpush.bf16.msra.mxu0 %v2436
    %2548 = vmatpush.bf16.msra.mxu0 %v2434
    %2549 = vmatpush.bf16.msra.mxu0 %v2432
    %2550 = vmatpush.bf16.msra.mxu0 %v2430
    %2551 = vmatpush.bf16.msra.mxu0 %v2428
    %2552 = vmatpush.bf16.msra.mxu0 %v2426
    %2553 = vmatmul.bf16.gmra.mxu0 %v2115
    %v2554 = vpop.f32.mrf.mxu0
    %v2555 = vadd.f32 %v2542, %v2554
    %v2556 = vpop.f32.mrf.mxu0
    %2557 = vdwg.mxu0
    %2558 = vmatpush.bf16.msra.mxu0 %v2393
    %2559 = vmatpush.bf16.msra.mxu0 %v2391
    %2560 = vmatpush.bf16.msra.mxu0 %v2389
    %2561 = vmatpush.bf16.msra.mxu0 %v2387
    %2562 = vmatpush.bf16.msra.mxu0 %v2385
    %2563 = vmatpush.bf16.msra.mxu0 %v2383
    %2564 = vmatpush.bf16.msra.mxu0 %v2381
    %2565 = vmatpush.bf16.msra.mxu0 %v2379
    %2566 = vmatmul.bf16.gmra.mxu0 %v2112
    %v2567 = vpop.f32.mrf.mxu0
    %v2568 = vadd.f32 %v2183, %v2567
    %v2569 = vpop.f32.mrf.mxu0
    %2570 = vdwg.mxu0
    %2571 = vmatpush.bf16.msra.mxu0 %v2409
    %2572 = vmatpush.bf16.msra.mxu0 %v2407
    %2573 = vmatpush.bf16.msra.mxu0 %v2405
    %2574 = vmatpush.bf16.msra.mxu0 %v2403
    %2575 = vmatpush.bf16.msra.mxu0 %v2401
    %2576 = vmatpush.bf16.msra.mxu0 %v2399
    %2577 = vmatpush.bf16.msra.mxu0 %v2397
    %2578 = vmatpush.bf16.msra.mxu0 %v2395
    %2579 = vmatmul.bf16.gmra.mxu0 %v2113
    %v2580 = vpop.f32.mrf.mxu0
    %v2581 = vadd.f32 %v2568, %v2580
    %v2582 = vpop.f32.mrf.mxu0
    %2583 = vdwg.mxu0
    %2584 = vmatpush.bf16.msra.mxu0 %v2425
    %2585 = vmatpush.bf16.msra.mxu0 %v2423
    %2586 = vmatpush.bf16.msra.mxu0 %v2421
    %2587 = vmatpush.bf16.msra.mxu0 %v2419
    %2588 = vmatpush.bf16.msra.mxu0 %v2417
    %2589 = vmatpush.bf16.msra.mxu0 %v2415
    %2590 = vmatpush.bf16.msra.mxu0 %v2413
    %2591 = vmatpush.bf16.msra.mxu0 %v2411
    %2592 = vmatmul.bf16.gmra.mxu0 %v2114
    %v2593 = vpop.f32.mrf.mxu0
    %v2594 = vadd.f32 %v2581, %v2593
    %v2595 = vpop.f32.mrf.mxu0
    %2596 = vdwg.mxu0
    %2597 = vmatpush.bf16.msra.mxu0 %v2441
    %2598 = vmatpush.bf16.msra.mxu0 %v2439
    %2599 = vmatpush.bf16.msra.mxu0 %v2437
    %2600 = vmatpush.bf16.msra.mxu0 %v2435
    %2601 = vmatpush.bf16.msra.mxu0 %v2433
    %2602 = vmatpush.bf16.msra.mxu0 %v2431
    %2603 = vmatpush.bf16.msra.mxu0 %v2429
    %2604 = vmatpush.bf16.msra.mxu0 %v2427
    %2605 = vmatmul.bf16.gmra.mxu0 %v2115
    %v2606 = vpop.f32.mrf.mxu0
    %v2607 = vadd.f32 %v2594, %v2606
    %v2608 = vpop.f32.mrf.mxu0
    %2609 = vdwg.mxu0
    %v2610 = vmul.f32 %v2555, 0.2
    %v2611 = vmul.f32 %v2607, 0.2
    %v2612 = vmax.f32 %v2555, %v2610
    %v2613 = vmax.f32 %v2607, %v2611
    %v2614 = vpack.c.bf16 %v2612, %v2612
    %v2615 = vpack.c.bf16 %v2613, %v2613
    %v2616 = vld [vmem:[#allocation10] sm:$0xff]
    %v2617 = vld [vmem:[#allocation10 + $0x8] sm:$0xff]
    %v2618 = vld [vmem:[#allocation10 + $0x10] sm:$0xff]
    %v2619 = vld [vmem:[#allocation10 + $0x18] sm:$0xff]
    %v2620 = vld [vmem:[#allocation10 + $0x20] sm:$0xff]
    %v2621 = vld [vmem:[#allocation10 + $0x28] sm:$0xff]
    %v2622 = vld [vmem:[#allocation10 + $0x30] sm:$0xff]
    %v2623 = vld [vmem:[#allocation10 + $0x38] sm:$0xff]
    %v2624 = vld [vmem:[#allocation10 + $0x40] sm:$0xff]
    %v2625 = vld [vmem:[#allocation10 + $0x48] sm:$0xff]
    %v2626 = vld [vmem:[#allocation10 + $0x50] sm:$0xff]
    %v2627 = vld [vmem:[#allocation10 + $0x58] sm:$0xff]
    %v2628 = vld [vmem:[#allocation10 + $0x60] sm:$0xff]
    %v2629 = vld [vmem:[#allocation10 + $0x68] sm:$0xff]
    %v2630 = vld [vmem:[#allocation10 + $0x70] sm:$0xff]
    %v2631 = vld [vmem:[#allocation10 + $0x78] sm:$0xff]
    %v2632 = vld [vmem:[#allocation10 + $0x80] sm:$0xff]
    %v2633 = vld [vmem:[#allocation10 + $0x88] sm:$0xff]
    %v2634 = vld [vmem:[#allocation10 + $0x90] sm:$0xff]
    %v2635 = vld [vmem:[#allocation10 + $0x98] sm:$0xff]
    %v2636 = vld [vmem:[#allocation10 + $0xa0] sm:$0xff]
    %v2637 = vld [vmem:[#allocation10 + $0xa8] sm:$0xff]
    %v2638 = vld [vmem:[#allocation10 + $0xb0] sm:$0xff]
    %v2639 = vld [vmem:[#allocation10 + $0xb8] sm:$0xff]
    %v2640 = vld [vmem:[#allocation10 + $0xc0] sm:$0xff]
    %v2641 = vld [vmem:[#allocation10 + $0xc8] sm:$0xff]
    %v2642 = vld [vmem:[#allocation10 + $0xd0] sm:$0xff]
    %v2643 = vld [vmem:[#allocation10 + $0xd8] sm:$0xff]
    %v2644 = vld [vmem:[#allocation10 + $0xe0] sm:$0xff]
    %v2645 = vld [vmem:[#allocation10 + $0xe8] sm:$0xff]
    %v2646 = vld [vmem:[#allocation10 + $0xf0] sm:$0xff]
    %v2647 = vld [vmem:[#allocation10 + $0xf8] sm:$0xff]
    %v2648 = vld [vmem:[%s6] sm:$0x3]
    %v2650 = vperm.slane %v2648, 0
    %v2651 = vperm.slane %v2648, 1
    %v2686 = vunpack.c.l.b16 %v2616
    %v2687 = vunpack.c.h.b16 %v2616
    %v2688 = vunpack.c.l.b16 %v2617
    %v2689 = vunpack.c.h.b16 %v2617
    %v2690 = vunpack.c.l.b16 %v2618
    %v2691 = vunpack.c.h.b16 %v2618
    %v2692 = vunpack.c.l.b16 %v2619
    %v2693 = vunpack.c.h.b16 %v2619
    %v2694 = vunpack.c.l.b16 %v2620
    %v2695 = vunpack.c.h.b16 %v2620
    %v2696 = vunpack.c.l.b16 %v2621
    %v2697 = vunpack.c.h.b16 %v2621
    %v2698 = vunpack.c.l.b16 %v2622
    %v2699 = vunpack.c.h.b16 %v2622
    %v2700 = vunpack.c.l.b16 %v2623
    %v2701 = vunpack.c.h.b16 %v2623
    %v2702 = vunpack.c.l.b16 %v2624
    %v2703 = vunpack.c.h.b16 %v2624
    %v2704 = vunpack.c.l.b16 %v2625
    %v2705 = vunpack.c.h.b16 %v2625
    %v2706 = vunpack.c.l.b16 %v2626
    %v2707 = vunpack.c.h.b16 %v2626
    %v2708 = vunpack.c.l.b16 %v2627
    %v2709 = vunpack.c.h.b16 %v2627
    %v2710 = vunpack.c.l.b16 %v2628
    %v2711 = vunpack.c.h.b16 %v2628
    %v2712 = vunpack.c.l.b16 %v2629
    %v2713 = vunpack.c.h.b16 %v2629
    %v2714 = vunpack.c.l.b16 %v2630
    %v2715 = vunpack.c.h.b16 %v2630
    %v2716 = vunpack.c.l.b16 %v2631
    %v2717 = vunpack.c.h.b16 %v2631
    %v2718 = vunpack.c.l.b16 %v2632
    %v2719 = vunpack.c.h.b16 %v2632
    %v2720 = vunpack.c.l.b16 %v2633
    %v2721 = vunpack.c.h.b16 %v2633
    %v2722 = vunpack.c.l.b16 %v2634
    %v2723 = vunpack.c.h.b16 %v2634
    %v2724 = vunpack.c.l.b16 %v2635
    %v2725 = vunpack.c.h.b16 %v2635
    %v2726 = vunpack.c.l.b16 %v2636
    %v2727 = vunpack.c.h.b16 %v2636
    %v2728 = vunpack.c.l.b16 %v2637
    %v2729 = vunpack.c.h.b16 %v2637
    %v2730 = vunpack.c.l.b16 %v2638
    %v2731 = vunpack.c.h.b16 %v2638
    %v2732 = vunpack.c.l.b16 %v2639
    %v2733 = vunpack.c.h.b16 %v2639
    %v2734 = vunpack.c.l.b16 %v2640
    %v2735 = vunpack.c.h.b16 %v2640
    %v2736 = vunpack.c.l.b16 %v2641
    %v2737 = vunpack.c.h.b16 %v2641
    %v2738 = vunpack.c.l.b16 %v2642
    %v2739 = vunpack.c.h.b16 %v2642
    %v2740 = vunpack.c.l.b16 %v2643
    %v2741 = vunpack.c.h.b16 %v2643
    %v2742 = vunpack.c.l.b16 %v2644
    %v2743 = vunpack.c.h.b16 %v2644
    %v2744 = vunpack.c.l.b16 %v2645
    %v2745 = vunpack.c.h.b16 %v2645
    %v2746 = vunpack.c.l.b16 %v2646
    %v2747 = vunpack.c.h.b16 %v2646
    %v2748 = vunpack.c.l.b16 %v2647
    %v2749 = vunpack.c.h.b16 %v2647
    %v2750 = vpack.c.b16 %v2688, %v2686
    %v2751 = vpack.c.b16 %v2689, %v2687
    %v2752 = vpack.c.b16 %v2692, %v2690
    %v2753 = vpack.c.b16 %v2693, %v2691
    %v2754 = vpack.c.b16 %v2696, %v2694
    %v2755 = vpack.c.b16 %v2697, %v2695
    %v2756 = vpack.c.b16 %v2700, %v2698
    %v2757 = vpack.c.b16 %v2701, %v2699
    %v2758 = vpack.c.b16 %v2704, %v2702
    %v2759 = vpack.c.b16 %v2705, %v2703
    %v2760 = vpack.c.b16 %v2708, %v2706
    %v2761 = vpack.c.b16 %v2709, %v2707
    %v2762 = vpack.c.b16 %v2712, %v2710
    %v2763 = vpack.c.b16 %v2713, %v2711
    %v2764 = vpack.c.b16 %v2716, %v2714
    %v2765 = vpack.c.b16 %v2717, %v2715
    %v2766 = vpack.c.b16 %v2720, %v2718
    %v2767 = vpack.c.b16 %v2721, %v2719
    %v2768 = vpack.c.b16 %v2724, %v2722
    %v2769 = vpack.c.b16 %v2725, %v2723
    %v2770 = vpack.c.b16 %v2728, %v2726
    %v2771 = vpack.c.b16 %v2729, %v2727
    %v2772 = vpack.c.b16 %v2732, %v2730
    %v2773 = vpack.c.b16 %v2733, %v2731
    %v2774 = vpack.c.b16 %v2736, %v2734
    %v2775 = vpack.c.b16 %v2737, %v2735
    %v2776 = vpack.c.b16 %v2740, %v2738
    %v2777 = vpack.c.b16 %v2741, %v2739
    %v2778 = vpack.c.b16 %v2744, %v2742
    %v2779 = vpack.c.b16 %v2745, %v2743
    %v2780 = vpack.c.b16 %v2748, %v2746
    %v2781 = vpack.c.b16 %v2749, %v2747
    %2814 = vmatpush.bf16.msra.mxu0 %v2764
    %2815 = vmatpush.bf16.msra.mxu0 %v2762
    %2816 = vmatpush.bf16.msra.mxu0 %v2760
    %2817 = vmatpush.bf16.msra.mxu0 %v2758
    %2818 = vmatpush.bf16.msra.mxu0 %v2756
    %2819 = vmatpush.bf16.msra.mxu0 %v2754
    %2820 = vmatpush.bf16.msra.mxu0 %v2752
    %2821 = vmatpush.bf16.msra.mxu0 %v2750
    %2822 = vmatmul.bf16.gmra.mxu0 %v2614
    %v2823 = vpop.f32.mrf.mxu0
    %v2824 = vadd.f32 %v2650, %v2823
    %v2825 = vpop.f32.mrf.mxu0
    %2826 = vdwg.mxu0
    %2827 = vmatpush.bf16.msra.mxu0 %v2780
    %2828 = vmatpush.bf16.msra.mxu0 %v2778
    %2829 = vmatpush.bf16.msra.mxu0 %v2776
    %2830 = vmatpush.bf16.msra.mxu0 %v2774
    %2831 = vmatpush.bf16.msra.mxu0 %v2772
    %2832 = vmatpush.bf16.msra.mxu0 %v2770
    %2833 = vmatpush.bf16.msra.mxu0 %v2768
    %2834 = vmatpush.bf16.msra.mxu0 %v2766
    %2835 = vmatmul.bf16.gmra.mxu0 %v2615
    %v2836 = vpop.f32.mrf.mxu0
    %v2837 = vadd.f32 %v2824, %v2836
    %v2838 = vpop.f32.mrf.mxu0
    %2839 = vdwg.mxu0
    %2840 = vmatpush.bf16.msra.mxu0 %v2765
    %2841 = vmatpush.bf16.msra.mxu0 %v2763
    %2842 = vmatpush.bf16.msra.mxu0 %v2761
    %2843 = vmatpush.bf16.msra.mxu0 %v2759
    %2844 = vmatpush.bf16.msra.mxu0 %v2757
    %2845 = vmatpush.bf16.msra.mxu0 %v2755
    %2846 = vmatpush.bf16.msra.mxu0 %v2753
    %2847 = vmatpush.bf16.msra.mxu0 %v2751
    %2848 = vmatmul.bf16.gmra.mxu0 %v2614
    %v2849 = vpop.f32.mrf.mxu0
    %v2850 = vadd.f32 %v2651, %v2849
    %v2851 = vpop.f32.mrf.mxu0
    %2852 = vdwg.mxu0
    %2853 = vmatpush.bf16.msra.mxu0 %v2781
    %2854 = vmatpush.bf16.msra.mxu0 %v2779
    %2855 = vmatpush.bf16.msra.mxu0 %v2777
    %2856 = vmatpush.bf16.msra.mxu0 %v2775
    %2857 = vmatpush.bf16.msra.mxu0 %v2773
    %2858 = vmatpush.bf16.msra.mxu0 %v2771
    %2859 = vmatpush.bf16.msra.mxu0 %v2769
    %2860 = vmatpush.bf16.msra.mxu0 %v2767
    %2861 = vmatmul.bf16.gmra.mxu0 %v2615
    %v2862 = vpop.f32.mrf.mxu0
    %v2863 = vadd.f32 %v2850, %v2862
    %v2864 = vpop.f32.mrf.mxu0
    %2865 = vdwg.mxu0
    %v2866 = vmul.f32 %v2837, 0.2
    %v2867 = vmul.f32 %v2863, 0.2
    %v2868 = vmax.f32 %v2837, %v2866
    %v2869 = vmax.f32 %v2863, %v2867
    %v2870 = vpack.c.bf16 %v2868, %v2868
    %v2871 = vpack.c.bf16 %v2869, %v2869
    %v2872 = vld [vmem:[#allocation11] sm:$0xf]
    %v2873 = vld [vmem:[#allocation11 + $0x4] sm:$0xf]
    %v2874 = vld [vmem:[#allocation11 + $0x8] sm:$0xf]
    %v2875 = vld [vmem:[#allocation11 + $0xc] sm:$0xf]
    %v2876 = vld [vmem:[#allocation11 + $0x10] sm:$0xf]
    %v2877 = vld [vmem:[#allocation11 + $0x14] sm:$0xf]
    %v2878 = vld [vmem:[#allocation11 + $0x18] sm:$0xf]
    %v2879 = vld [vmem:[#allocation11 + $0x1c] sm:$0xf]
    %v2880 = vld [vmem:[#allocation11 + $0x20] sm:$0xf]
    %v2881 = vld [vmem:[#allocation11 + $0x24] sm:$0xf]
    %v2882 = vld [vmem:[#allocation11 + $0x28] sm:$0xf]
    %v2883 = vld [vmem:[#allocation11 + $0x2c] sm:$0xf]
    %v2884 = vld [vmem:[#allocation11 + $0x30] sm:$0xf]
    %v2885 = vld [vmem:[#allocation11 + $0x34] sm:$0xf]
    %v2886 = vld [vmem:[#allocation11 + $0x38] sm:$0xf]
    %v2887 = vld [vmem:[#allocation11 + $0x3c] sm:$0xf]
    %v2888 = vld [vmem:[#allocation11 + $0x40] sm:$0xf]
    %v2889 = vld [vmem:[#allocation11 + $0x44] sm:$0xf]
    %v2890 = vld [vmem:[#allocation11 + $0x48] sm:$0xf]
    %v2891 = vld [vmem:[#allocation11 + $0x4c] sm:$0xf]
    %v2892 = vld [vmem:[#allocation11 + $0x50] sm:$0xf]
    %v2893 = vld [vmem:[#allocation11 + $0x54] sm:$0xf]
    %v2894 = vld [vmem:[#allocation11 + $0x58] sm:$0xf]
    %v2895 = vld [vmem:[#allocation11 + $0x5c] sm:$0xf]
    %v2896 = vld [vmem:[#allocation11 + $0x60] sm:$0xf]
    %v2897 = vld [vmem:[#allocation11 + $0x64] sm:$0xf]
    %v2898 = vld [vmem:[#allocation11 + $0x68] sm:$0xf]
    %v2899 = vld [vmem:[#allocation11 + $0x6c] sm:$0xf]
    %v2900 = vld [vmem:[#allocation11 + $0x70] sm:$0xf]
    %v2901 = vld [vmem:[#allocation11 + $0x74] sm:$0xf]
    %v2902 = vld [vmem:[#allocation11 + $0x78] sm:$0xf]
    %v2903 = vld [vmem:[#allocation11 + $0x7c] sm:$0xf]
    %v2904 = vld [vmem:[%s8] sm:$0x1]
    %v2906 = vperm.slane %v2904, 0
    %v2940 = vunpack.c.l.b16 %v2872
    %v2941 = vunpack.c.l.b16 %v2873
    %v2942 = vunpack.c.l.b16 %v2874
    %v2943 = vunpack.c.l.b16 %v2875
    %v2944 = vunpack.c.l.b16 %v2876
    %v2945 = vunpack.c.l.b16 %v2877
    %v2946 = vunpack.c.l.b16 %v2878
    %v2947 = vunpack.c.l.b16 %v2879
    %v2948 = vunpack.c.l.b16 %v2880
    %v2949 = vunpack.c.l.b16 %v2881
    %v2950 = vunpack.c.l.b16 %v2882
    %v2951 = vunpack.c.l.b16 %v2883
    %v2952 = vunpack.c.l.b16 %v2884
    %v2953 = vunpack.c.l.b16 %v2885
    %v2954 = vunpack.c.l.b16 %v2886
    %v2955 = vunpack.c.l.b16 %v2887
    %v2956 = vunpack.c.l.b16 %v2888
    %v2957 = vunpack.c.l.b16 %v2889
    %v2958 = vunpack.c.l.b16 %v2890
    %v2959 = vunpack.c.l.b16 %v2891
    %v2960 = vunpack.c.l.b16 %v2892
    %v2961 = vunpack.c.l.b16 %v2893
    %v2962 = vunpack.c.l.b16 %v2894
    %v2963 = vunpack.c.l.b16 %v2895
    %v2964 = vunpack.c.l.b16 %v2896
    %v2965 = vunpack.c.l.b16 %v2897
    %v2966 = vunpack.c.l.b16 %v2898
    %v2967 = vunpack.c.l.b16 %v2899
    %v2968 = vunpack.c.l.b16 %v2900
    %v2969 = vunpack.c.l.b16 %v2901
    %v2970 = vunpack.c.l.b16 %v2902
    %v2971 = vunpack.c.l.b16 %v2903
    %v2972 = vpack.c.b16 %v2941, %v2940
    %v2973 = vpack.c.b16 %v2943, %v2942
    %v2974 = vpack.c.b16 %v2945, %v2944
    %v2975 = vpack.c.b16 %v2947, %v2946
    %v2976 = vpack.c.b16 %v2949, %v2948
    %v2977 = vpack.c.b16 %v2951, %v2950
    %v2978 = vpack.c.b16 %v2953, %v2952
    %v2979 = vpack.c.b16 %v2955, %v2954
    %v2980 = vpack.c.b16 %v2957, %v2956
    %v2981 = vpack.c.b16 %v2959, %v2958
    %v2982 = vpack.c.b16 %v2961, %v2960
    %v2983 = vpack.c.b16 %v2963, %v2962
    %v2984 = vpack.c.b16 %v2965, %v2964
    %v2985 = vpack.c.b16 %v2967, %v2966
    %v2986 = vpack.c.b16 %v2969, %v2968
    %v2987 = vpack.c.b16 %v2971, %v2970
    %3004 = vmatpush.bf16.msra.mxu0 %v2979
    %3005 = vmatpush.bf16.msra.mxu0 %v2978
    %3006 = vmatpush.bf16.msra.mxu0 %v2977
    %3007 = vmatpush.bf16.msra.mxu0 %v2976
    %3008 = vmatpush.bf16.msra.mxu0 %v2975
    %3009 = vmatpush.bf16.msra.mxu0 %v2974
    %3010 = vmatpush.bf16.msra.mxu0 %v2973
    %3011 = vmatpush.bf16.msra.mxu0 %v2972
    %3012 = vmatmul.bf16.gmra.mxu0 %v2870
    %v3013 = vpop.f32.mrf.mxu0
    %v3014 = vadd.f32 %v2906, %v3013
    %v3015 = vpop.f32.mrf.mxu0
    %3016 = vdwg.mxu0
    %3017 = vmatpush.bf16.msra.mxu0 %v2987
    %3018 = vmatpush.bf16.msra.mxu0 %v2986
    %3019 = vmatpush.bf16.msra.mxu0 %v2985
    %3020 = vmatpush.bf16.msra.mxu0 %v2984
    %3021 = vmatpush.bf16.msra.mxu0 %v2983
    %3022 = vmatpush.bf16.msra.mxu0 %v2982
    %3023 = vmatpush.bf16.msra.mxu0 %v2981
    %3024 = vmatpush.bf16.msra.mxu0 %v2980
    %3025 = vmatmul.bf16.gmra.mxu0 %v2871
    %v3026 = vpop.f32.mrf.mxu0
    %v3027 = vadd.f32 %v3014, %v3026
    %v3028 = vpop.f32.mrf.mxu0
    %3029 = vdwg.mxu0
    %v3030 = vpack.c.bf16 %v3027, %v3027
    %3031 = vst [vmem:[#allocation13] sm:$0x1] %v3030
    // Predicated region
    $region62: #{tpu_custom_call.1} parent=1 // pred_check
      _
    $region63: #{tpu_custom_call.1} parent=1 // pred_check_branch
      %3033 = sbr.rel (0) target = $region65
    $region64: #{tpu_custom_call.1} parent=1 // pred_region
      %3035 = vsyncadd [#allocation4], 0
      %s3037 = sshll.u32 [#allocation13], 4
      %s3038 = int_to_ptr.vmem [resolvable:$true] %s3037
      %s3039 = sshll.u32 %s9, 4
      %s3040 = int_to_ptr.hbm [resolvable:$true] %s3039
      %3042 = dma.vmem_to_hbm [thread:$0]  %s3038, 16, %s3040, [#allocation4]
    $region65: #{tpu_custom_call.1} parent=1 // pred_fallthru
      _
    // Predicated region
    $region66: #{tpu_custom_call.1} parent=1 // pred_check
      _
    $region67: #{tpu_custom_call.1} parent=1 // pred_check_branch
      %3044 = sbr.rel (0) target = $region69
    $region68: #{tpu_custom_call.1} parent=1 // pred_region
      %3046 = dma.done [#allocation4], 16
    $region69: #{tpu_custom_call.1} parent=1 // pred_fallthru
      _
    %3047 = vsyncpa [#allocation3], 1
    %3048 = vsyncpa [#allocation6], 1
    %3049 = vsyncpa [#allocation9], 1
    %3050 = vsyncpa [#allocation12], 1
    %3051 = vsyncpa [#allocation4], 1

</llo_original>
